<compile_context>
chip_gen: v7x
topology: tpu7x:2x2x1
jax: 0.10.0
libtpu: 0.0.40
codegen_flags: <defaults>
</compile_context>

<pallas_src>
import jax
import jax.numpy as jnp
import numpy as np
from jax.experimental import pallas as pl
from jax.experimental.pallas import tpu as pltpu

# ---- model hyper-parameters (small, consistent with the module) ----
B = 2           # batch
N = 8           # sequence length (tokens)
C = 32          # embedding dim
NUM_HEADS = 4   # heads
HEAD_DIM = C // NUM_HEADS
MLP_RATIO = 4.0
H = int(C * MLP_RATIO)     # mlp hidden dim = 128
LN_EPS = 1e-5              # nn.LayerNorm default
SCALE = HEAD_DIM ** -0.5   # qk_scale default
INV_SQRT2 = 0.7071067811865476


def _layernorm(v, g, b):
    mu = jnp.mean(v, axis=-1, keepdims=True)
    var = jnp.mean((v - mu) ** 2, axis=-1, keepdims=True)
    return (v - mu) * jax.lax.rsqrt(var + LN_EPS) * g + b


def blocks_kernel(x_ref, wattn_ref, wfc1_ref, wfc2_ref, vecc_ref, vech_ref, o_ref):
    """One grid step = one batch element; loops over L fused Blocks in VMEM."""
    Nn, Cc = x_ref.shape
    L = wfc1_ref.shape[0]
    x = x_ref[...]                                   # (N, C) f32, stays resident

    for l in range(L):                               # static unrolled layer loop
        g1 = vecc_ref[6 * l + 0]
        b1 = vecc_ref[6 * l + 1]
        g2 = vecc_ref[6 * l + 2]
        b2 = vecc_ref[6 * l + 3]
        bproj = vecc_ref[6 * l + 4]
        bf2 = vecc_ref[6 * l + 5]
        bf1 = vech_ref[l]

        # ---------- Attention(LayerNorm(x)) ----------
        xn = _layernorm(x, g1, b1)
        xnb = xn.astype(jnp.bfloat16)                # bf16 MXU operands, f32 acc
        q = jnp.dot(xnb, wattn_ref[4 * l + 0], preferred_element_type=jnp.float32)
        k = jnp.dot(xnb, wattn_ref[4 * l + 1], preferred_element_type=jnp.float32)
        v = jnp.dot(xnb, wattn_ref[4 * l + 2], preferred_element_type=jnp.float32)

        def heads(t):
            # (N, C) -> (heads, N, d); q/k/v columns are already head-contiguous
            return jnp.transpose(t.reshape(Nn, NUM_HEADS, HEAD_DIM), (1, 0, 2))

        qh, kh, vh = heads(q), heads(k), heads(v)

        s = jnp.einsum('hnd,hmd->hnm', qh, kh,
                       preferred_element_type=jnp.float32) * SCALE
        s = s - jnp.max(s, axis=-1, keepdims=True)
        p = jnp.exp(s)
        p = p / jnp.sum(p, axis=-1, keepdims=True)   # exact softmax (review)
        oh = jnp.einsum('hnm,hmd->hnd', p, vh,
                        preferred_element_type=jnp.float32)
        attn = jnp.transpose(oh, (1, 0, 2)).reshape(Nn, Cc)   # head concat
        attn = jnp.dot(attn.astype(jnp.bfloat16), wattn_ref[4 * l + 3],
                       preferred_element_type=jnp.float32) + bproj
        x = x + attn                                 # residual 1 (f32)

        # ---------- Mlp(LayerNorm(x)) ----------
        xn2 = _layernorm(x, g2, b2)
        h1 = jnp.dot(xn2.astype(jnp.bfloat16), wfc1_ref[l],
                     preferred_element_type=jnp.float32) + bf1
        # exact GELU (erf form), matching nn.GELU default
        h1 = 0.5 * h1 * (1.0 + jax.lax.erf(h1 * INV_SQRT2))
        h2 = jnp.dot(h1.astype(jnp.bfloat16), wfc2_ref[l],
                     preferred_element_type=jnp.float32) + bf2
        x = x + h2                                   # residual 2 (f32)

    o_ref[...] = x.astype(o_ref.dtype)


def pack_layers(layers):
    """Pack per-layer PyTorch-style params into a few DMA-friendly slabs."""
    wattn, wfc1, wfc2, vecc, vech = [], [], [], [], []
    for (g1, b1, wqkv, wproj, bproj, g2, b2, w1, bf1, w2, bf2) in layers:
        # host-side split of the fused qkv weight (columns are already
        # head-contiguous within each C-wide block) -> no in-kernel lane slices
        wattn += [wqkv[:, 0:C], wqkv[:, C:2 * C], wqkv[:, 2 * C:3 * C], wproj]
        wfc1.append(w1)
        wfc2.append(w2)
        vecc += [g1, b1, g2, b2, bproj, bf2]
        vech.append(bf1)
    wattn = jnp.stack(wattn).astype(jnp.bfloat16)    # (4L, C, C)
    wfc1 = jnp.stack(wfc1).astype(jnp.bfloat16)      # (L, C, H)
    wfc2 = jnp.stack(wfc2).astype(jnp.bfloat16)      # (L, H, C)
    vecc = jnp.stack(vecc).astype(jnp.float32)       # (6L, C)
    vech = jnp.stack(vech).astype(jnp.float32)       # (L, H)
    return wattn, wfc1, wfc2, vecc, vech


def transformer_blocks(x, packed):
    """Apply L fused transformer Blocks (L=1 == the original module)."""
    wattn, wfc1, wfc2, vecc, vech = packed
    Bx, Nx, Cx = x.shape
    Lx, _, Hx = wfc1.shape
    x2 = x.reshape(Bx * Nx, Cx)

    def resident(a):
        # whole array resident in VMEM; same block every grid step -> one DMA
        nd = a.ndim
        return pl.BlockSpec(a.shape, lambda b, _nd=nd: (0,) * _nd)

    d = Cx // NUM_HEADS
    flops = Bx * Lx * (4 * 2 * Nx * Cx * Cx          # qkv (3) + proj
                       + 2 * 2 * NUM_HEADS * Nx * Nx * d   # q@kT + p@v
                       + 2 * 2 * Nx * Cx * Hx)       # fc1 + fc2
    transc = Bx * Lx * (NUM_HEADS * Nx * Nx + Nx * Hx + 4 * Nx)  # exp+erf+rsqrt
    bytes_acc = (2 * Bx * Nx * Cx * 4
                 + Lx * ((4 * Cx * Cx + 2 * Cx * Hx) * 2 + (6 * Cx + Hx) * 4))

    out = pl.pallas_call(
        blocks_kernel,
        out_shape=jax.ShapeDtypeStruct((Bx * Nx, Cx), x.dtype),
        grid=(Bx,),
        in_specs=[pl.BlockSpec((Nx, Cx), lambda b: (b, 0)),
                  resident(wattn), resident(wfc1), resident(wfc2),
                  resident(vecc), resident(vech)],
        out_specs=pl.BlockSpec((Nx, Cx), lambda b: (b, 0)),
        compiler_params=pltpu.CompilerParams(
            # batches are independent -> both v7x TensorCores can run;
            # no-op on single-TC v5e/v6e.
            dimension_semantics=("parallel",)),
        cost_estimate=pl.CostEstimate(flops=flops, transcendentals=transc,
                                      bytes_accessed=bytes_acc),
    )(x2, wattn, wfc1, wfc2, vecc, vech)
    return out.reshape(Bx, Nx, Cx)


# ---- pure-JAX fp32 reference (mirrors the PyTorch Block.forward) ----
def block_reference(x, params):
    g1, b1, wqkv, wproj, bproj, g2, b2, w1, bf1, w2, bf2 = params

    def ln(v, g, b):
        mu = jnp.mean(v, axis=-1, keepdims=True)
        var = jnp.mean((v - mu) ** 2, axis=-1, keepdims=True)
        return (v - mu) / jnp.sqrt(var + LN_EPS) * g + b

    Bx, Nx, Cx = x.shape
    xn = ln(x, g1, b1)
    qkv = xn @ wqkv                                            # (B, N, 3C)
    qkv = qkv.reshape(Bx, Nx, 3, NUM_HEADS, HEAD_DIM)
    qkv = jnp.transpose(qkv, (2, 0, 3, 1, 4))                  # (3, B, h, N, d)
    q, k, v = qkv[0], qkv[1], qkv[2]
    attn = jnp.einsum('bhnd,bhmd->bhnm', q, k) * SCALE
    attn = jax.nn.softmax(attn, axis=-1)
    o = jnp.einsum('bhnm,bhmd->bhnd', attn, v)
    o = jnp.transpose(o, (0, 2, 1, 3)).reshape(Bx, Nx, Cx)
    x = x + (o @ wproj + bproj)
    xn2 = ln(x, g2, b2)
    h = xn2 @ w1 + bf1
    h = 0.5 * h * (1.0 + jax.lax.erf(h * INV_SQRT2))
    return x + (h @ w2 + bf2)


def make_params(key):
    ks = jax.random.split(key, 10)
    std = 0.02
    g1 = 1.0 + 0.1 * jax.random.normal(ks[0], (C,), jnp.float32)
    b1 = 0.02 * jax.random.normal(ks[1], (C,), jnp.float32)
    wqkv = std * jax.random.normal(ks[2], (C, 3 * C), jnp.float32)  # qkv_bias=False
    wproj = std * jax.random.normal(ks[3], (C, C), jnp.float32)
    bproj = std * jax.random.normal(ks[4], (C,), jnp.float32)
    g2 = 1.0 + 0.1 * jax.random.normal(ks[5], (C,), jnp.float32)
    b2 = 0.02 * jax.random.normal(ks[6], (C,), jnp.float32)
    w1 = std * jax.random.normal(ks[7], (C, H), jnp.float32)
    bf1 = std * jax.random.normal(ks[8], (H,), jnp.float32)
    w2 = std * jax.random.normal(ks[9], (H, C), jnp.float32)
    bf2 = jnp.zeros((C,), jnp.float32)
    return [g1, b1, wqkv, wproj, bproj, g2, b2, w1, bf1, w2, bf2]


if __name__ == "__main__":
    key = jax.random.PRNGKey(0)
    kx, kp = jax.random.split(key)
    x = jax.random.normal(kx, (B, N, C), jnp.float32)

    # ---- single Block: exact semantics of the PyTorch module (L = 1) ----
    params = make_params(kp)
    out = transformer_blocks(x, pack_layers([params]))
    out = jax.block_until_ready(out)
    ref = block_reference(x, params)
    # bf16 MXU operands vs fp32 reference -> ~1e-4 abs error expected
    np.testing.assert_allclose(np.asarray(out), np.asarray(ref),
                               rtol=1e-2, atol=3e-3)

    # ---- fused 3-layer stack: the layer-fusion optimization path ----
    layer_keys = jax.random.split(kp, 3)
    layers = [make_params(k) for k in layer_keys]
    out3 = jax.block_until_ready(transformer_blocks(x, pack_layers(layers)))
    ref3 = x
    for p in layers:
        ref3 = block_reference(ref3, p)
    np.testing.assert_allclose(np.asarray(out3), np.asarray(ref3),
                               rtol=1e-2, atol=1e-2)

    print("KERNEL_OK")
</pallas_src>

<mosaic_0001>
module attributes {stable_mosaic.version = 11 : i64} {
  func.func @blocks_kernel(%arg0: i32, %arg1: memref<8x32xf32, #tpu.memory_space<vmem>>, %arg2: memref<4x32x32xbf16, #tpu.memory_space<vmem>>, %arg3: memref<1x32x128xbf16, #tpu.memory_space<vmem>>, %arg4: memref<1x128x32xbf16, #tpu.memory_space<vmem>>, %arg5: memref<6x32xf32, #tpu.memory_space<vmem>>, %arg6: memref<1x128xf32, #tpu.memory_space<vmem>>, %arg7: memref<8x32xf32, #tpu.memory_space<vmem>>) attributes {dimension_semantics = [#tpu.dimension_semantics<parallel>], iteration_bounds = array<i64: 2>, scalar_prefetch = 0 : i64, scratch_operands = 0 : i64, tpu.core_type = #tpu.core_type<tc>, window_params = [{transform_indices = @transform_0, window_bounds = array<i64: 8, 32>}, {pipeline_mode = #tpu.pipeline_mode<synchronous>, transform_indices = @transform_1, window_bounds = array<i64: 4, 32, 32>}, {pipeline_mode = #tpu.pipeline_mode<synchronous>, transform_indices = @transform_2, window_bounds = array<i64: 1, 32, 128>}, {pipeline_mode = #tpu.pipeline_mode<synchronous>, transform_indices = @transform_3, window_bounds = array<i64: 1, 128, 32>}, {pipeline_mode = #tpu.pipeline_mode<synchronous>, transform_indices = @transform_4, window_bounds = array<i64: 6, 32>}, {pipeline_mode = #tpu.pipeline_mode<synchronous>, transform_indices = @transform_5, window_bounds = array<i64: 1, 128>}, {transform_indices = @transform_6, window_bounds = array<i64: 8, 32>}]} {
    %c0 = arith.constant 0 : index
    %c0_0 = arith.constant 0 : index
    %0 = vector.load %arg1[%c0, %c0_0] : memref<8x32xf32, #tpu.memory_space<vmem>>, vector<8x32xf32>
    %c0_1 = arith.constant 0 : index
    %c0_2 = arith.constant 0 : index
    %1 = vector.load %arg5[%c0_1, %c0_2] : memref<6x32xf32, #tpu.memory_space<vmem>>, vector<1x32xf32>
    %2 = vector.shape_cast %1 : vector<1x32xf32> to vector<32xf32>
    %c1 = arith.constant 1 : index
    %c0_3 = arith.constant 0 : index
    %3 = vector.load %arg5[%c1, %c0_3] : memref<6x32xf32, #tpu.memory_space<vmem>>, vector<1x32xf32>
    %4 = vector.shape_cast %3 : vector<1x32xf32> to vector<32xf32>
    %c2 = arith.constant 2 : index
    %c0_4 = arith.constant 0 : index
    %5 = vector.load %arg5[%c2, %c0_4] : memref<6x32xf32, #tpu.memory_space<vmem>>, vector<1x32xf32>
    %6 = vector.shape_cast %5 : vector<1x32xf32> to vector<32xf32>
    %c3 = arith.constant 3 : index
    %c0_5 = arith.constant 0 : index
    %7 = vector.load %arg5[%c3, %c0_5] : memref<6x32xf32, #tpu.memory_space<vmem>>, vector<1x32xf32>
    %8 = vector.shape_cast %7 : vector<1x32xf32> to vector<32xf32>
    %c4 = arith.constant 4 : index
    %c0_6 = arith.constant 0 : index
    %9 = vector.load %arg5[%c4, %c0_6] : memref<6x32xf32, #tpu.memory_space<vmem>>, vector<1x32xf32>
    %10 = vector.shape_cast %9 : vector<1x32xf32> to vector<32xf32>
    %c5 = arith.constant 5 : index
    %c0_7 = arith.constant 0 : index
    %11 = vector.load %arg5[%c5, %c0_7] : memref<6x32xf32, #tpu.memory_space<vmem>>, vector<1x32xf32>
    %12 = vector.shape_cast %11 : vector<1x32xf32> to vector<32xf32>
    %c0_8 = arith.constant 0 : index
    %c0_9 = arith.constant 0 : index
    %13 = vector.load %arg6[%c0_8, %c0_9] : memref<1x128xf32, #tpu.memory_space<vmem>>, vector<1x128xf32>
    %14 = vector.shape_cast %13 : vector<1x128xf32> to vector<128xf32>
    %cst = arith.constant dense<0.000000e+00> : vector<8xf32>
    %15 = vector.multi_reduction <add>, %0, %cst [1] : vector<8x32xf32> to vector<8xf32>
    %16 = vector.shape_cast %15 : vector<8xf32> to vector<8x1xf32>
    %cst_10 = arith.constant 3.200000e+01 : f32
    %17 = vector.broadcast %cst_10 : f32 to vector<8x1xf32>
    %18 = arith.divf %16, %17 : vector<8x1xf32>
    %19 = vector.broadcast %18 : vector<8x1xf32> to vector<8x32xf32>
    %20 = arith.subf %0, %19 : vector<8x32xf32>
    %21 = arith.mulf %20, %20 : vector<8x32xf32>
    %cst_11 = arith.constant dense<0.000000e+00> : vector<8xf32>
    %22 = vector.multi_reduction <add>, %21, %cst_11 [1] : vector<8x32xf32> to vector<8xf32>
    %23 = vector.shape_cast %22 : vector<8xf32> to vector<8x1xf32>
    %cst_12 = arith.constant 3.200000e+01 : f32
    %24 = vector.broadcast %cst_12 : f32 to vector<8x1xf32>
    %25 = arith.divf %23, %24 : vector<8x1xf32>
    %26 = vector.broadcast %18 : vector<8x1xf32> to vector<8x32xf32>
    %27 = arith.subf %0, %26 : vector<8x32xf32>
    %cst_13 = arith.constant 9.99999974E-6 : f32
    %28 = vector.broadcast %cst_13 : f32 to vector<8x1xf32>
    %29 = arith.addf %25, %28 : vector<8x1xf32>
    %30 = math.rsqrt %29 : vector<8x1xf32>
    %31 = vector.broadcast %30 : vector<8x1xf32> to vector<8x32xf32>
    %32 = arith.mulf %27, %31 : vector<8x32xf32>
    %33 = vector.shape_cast %2 : vector<32xf32> to vector<1x32xf32>
    %34 = vector.broadcast %33 : vector<1x32xf32> to vector<8x32xf32>
    %35 = arith.mulf %32, %34 : vector<8x32xf32>
    %36 = vector.shape_cast %4 : vector<32xf32> to vector<1x32xf32>
    %37 = vector.broadcast %36 : vector<1x32xf32> to vector<8x32xf32>
    %38 = arith.addf %35, %37 : vector<8x32xf32>
    %39 = arith.truncf %38 : vector<8x32xf32> to vector<8x32xbf16>
    %c0_14 = arith.constant 0 : index
    %c0_15 = arith.constant 0 : index
    %c0_16 = arith.constant 0 : index
    %40 = vector.load %arg2[%c0_14, %c0_15, %c0_16] : memref<4x32x32xbf16, #tpu.memory_space<vmem>>, vector<1x32x32xbf16>
    %41 = vector.shape_cast %40 : vector<1x32x32xbf16> to vector<32x32xbf16>
    %cst_17 = arith.constant dense<0.000000e+00> : vector<8x32xf32>
    %42 = tpu.matmul %39, %41, %cst_17 {dimension_numbers = #tpu.dot_dimension_numbers<[1], [0], [0], [1], [0, 0, 1, 1], [], []>} : vector<8x32xbf16>, vector<32x32xbf16>, vector<8x32xf32> -> vector<8x32xf32>
    %c1_18 = arith.constant 1 : index
    %c0_19 = arith.constant 0 : index
    %c0_20 = arith.constant 0 : index
    %43 = vector.load %arg2[%c1_18, %c0_19, %c0_20] : memref<4x32x32xbf16, #tpu.memory_space<vmem>>, vector<1x32x32xbf16>
    %44 = vector.shape_cast %43 : vector<1x32x32xbf16> to vector<32x32xbf16>
    %cst_21 = arith.constant dense<0.000000e+00> : vector<8x32xf32>
    %45 = tpu.matmul %39, %44, %cst_21 {dimension_numbers = #tpu.dot_dimension_numbers<[1], [0], [0], [1], [0, 0, 1, 1], [], []>} : vector<8x32xbf16>, vector<32x32xbf16>, vector<8x32xf32> -> vector<8x32xf32>
    %c2_22 = arith.constant 2 : index
    %c0_23 = arith.constant 0 : index
    %c0_24 = arith.constant 0 : index
    %46 = vector.load %arg2[%c2_22, %c0_23, %c0_24] : memref<4x32x32xbf16, #tpu.memory_space<vmem>>, vector<1x32x32xbf16>
    %47 = vector.shape_cast %46 : vector<1x32x32xbf16> to vector<32x32xbf16>
    %cst_25 = arith.constant dense<0.000000e+00> : vector<8x32xf32>
    %48 = tpu.matmul %39, %47, %cst_25 {dimension_numbers = #tpu.dot_dimension_numbers<[1], [0], [0], [1], [0, 0, 1, 1], [], []>} : vector<8x32xbf16>, vector<32x32xbf16>, vector<8x32xf32> -> vector<8x32xf32>
    %49 = vector.shape_cast %42 : vector<8x32xf32> to vector<8x4x8xf32>
    %50 = tpu.transpose %49, [1, 0, 2] : vector<8x4x8xf32> -> vector<4x8x8xf32>
    %51 = vector.shape_cast %45 : vector<8x32xf32> to vector<8x4x8xf32>
    %52 = tpu.transpose %51, [1, 0, 2] : vector<8x4x8xf32> -> vector<4x8x8xf32>
    %53 = vector.shape_cast %48 : vector<8x32xf32> to vector<8x4x8xf32>
    %54 = tpu.transpose %53, [1, 0, 2] : vector<8x4x8xf32> -> vector<4x8x8xf32>
    "tpu.trace_start"() <{level = 10 : i32, message = "hnd,hmd->hnm"}> : () -> ()
    %cst_26 = arith.constant dense<0.000000e+00> : vector<4x8x8xf32>
    %55 = tpu.matmul %50, %52, %cst_26 {dimension_numbers = #tpu.dot_dimension_numbers<[2], [2], [1], [1], [0, 0, 0, 1, 1, 1], [0], [0]>} : vector<4x8x8xf32>, vector<4x8x8xf32>, vector<4x8x8xf32> -> vector<4x8x8xf32>
    "tpu.trace_stop"() : () -> ()
    %cst_27 = arith.constant 0.353553385 : f32
    %56 = vector.broadcast %cst_27 : f32 to vector<4x8x8xf32>
    %57 = arith.mulf %55, %56 : vector<4x8x8xf32>
    %cst_28 = arith.constant dense<0xFF800000> : vector<4x8xf32>
    %58 = vector.multi_reduction <maximumf>, %57, %cst_28 [2] : vector<4x8x8xf32> to vector<4x8xf32>
    %59 = vector.shape_cast %58 : vector<4x8xf32> to vector<4x8x1xf32>
    %60 = vector.broadcast %59 : vector<4x8x1xf32> to vector<4x8x8xf32>
    %61 = arith.subf %57, %60 : vector<4x8x8xf32>
    %62 = math.exp %61 : vector<4x8x8xf32>
    %cst_29 = arith.constant dense<0.000000e+00> : vector<4x8xf32>
    %63 = vector.multi_reduction <add>, %62, %cst_29 [2] : vector<4x8x8xf32> to vector<4x8xf32>
    %64 = vector.shape_cast %63 : vector<4x8xf32> to vector<4x8x1xf32>
    %65 = vector.broadcast %64 : vector<4x8x1xf32> to vector<4x8x8xf32>
    %66 = arith.divf %62, %65 : vector<4x8x8xf32>
    "tpu.trace_start"() <{level = 10 : i32, message = "hnm,hmd->hnd"}> : () -> ()
    %cst_30 = arith.constant dense<0.000000e+00> : vector<4x8x8xf32>
    %67 = tpu.matmul %66, %54, %cst_30 {dimension_numbers = #tpu.dot_dimension_numbers<[2], [1], [1], [2], [0, 0, 0, 1, 1, 2], [0], [0]>} : vector<4x8x8xf32>, vector<4x8x8xf32>, vector<4x8x8xf32> -> vector<4x8x8xf32>
    "tpu.trace_stop"() : () -> ()
    %68 = tpu.transpose %67, [1, 0, 2] : vector<4x8x8xf32> -> vector<8x4x8xf32>
    %69 = vector.shape_cast %68 : vector<8x4x8xf32> to vector<8x32xf32>
    %70 = arith.truncf %69 : vector<8x32xf32> to vector<8x32xbf16>
    %c3_31 = arith.constant 3 : index
    %c0_32 = arith.constant 0 : index
    %c0_33 = arith.constant 0 : index
    %71 = vector.load %arg2[%c3_31, %c0_32, %c0_33] : memref<4x32x32xbf16, #tpu.memory_space<vmem>>, vector<1x32x32xbf16>
    %72 = vector.shape_cast %71 : vector<1x32x32xbf16> to vector<32x32xbf16>
    %cst_34 = arith.constant dense<0.000000e+00> : vector<8x32xf32>
    %73 = tpu.matmul %70, %72, %cst_34 {dimension_numbers = #tpu.dot_dimension_numbers<[1], [0], [0], [1], [0, 0, 1, 1], [], []>} : vector<8x32xbf16>, vector<32x32xbf16>, vector<8x32xf32> -> vector<8x32xf32>
    %74 = vector.shape_cast %10 : vector<32xf32> to vector<1x32xf32>
    %75 = vector.broadcast %74 : vector<1x32xf32> to vector<8x32xf32>
    %76 = arith.addf %73, %75 : vector<8x32xf32>
    %77 = arith.addf %0, %76 : vector<8x32xf32>
    %cst_35 = arith.constant dense<0.000000e+00> : vector<8xf32>
    %78 = vector.multi_reduction <add>, %77, %cst_35 [1] : vector<8x32xf32> to vector<8xf32>
    %79 = vector.shape_cast %78 : vector<8xf32> to vector<8x1xf32>
    %cst_36 = arith.constant 3.200000e+01 : f32
    %80 = vector.broadcast %cst_36 : f32 to vector<8x1xf32>
    %81 = arith.divf %79, %80 : vector<8x1xf32>
    %82 = vector.broadcast %81 : vector<8x1xf32> to vector<8x32xf32>
    %83 = arith.subf %77, %82 : vector<8x32xf32>
    %84 = arith.mulf %83, %83 : vector<8x32xf32>
    %cst_37 = arith.constant dense<0.000000e+00> : vector<8xf32>
    %85 = vector.multi_reduction <add>, %84, %cst_37 [1] : vector<8x32xf32> to vector<8xf32>
    %86 = vector.shape_cast %85 : vector<8xf32> to vector<8x1xf32>
    %cst_38 = arith.constant 3.200000e+01 : f32
    %87 = vector.broadcast %cst_38 : f32 to vector<8x1xf32>
    %88 = arith.divf %86, %87 : vector<8x1xf32>
    %89 = vector.broadcast %81 : vector<8x1xf32> to vector<8x32xf32>
    %90 = arith.subf %77, %89 : vector<8x32xf32>
    %cst_39 = arith.constant 9.99999974E-6 : f32
    %91 = vector.broadcast %cst_39 : f32 to vector<8x1xf32>
    %92 = arith.addf %88, %91 : vector<8x1xf32>
    %93 = math.rsqrt %92 : vector<8x1xf32>
    %94 = vector.broadcast %93 : vector<8x1xf32> to vector<8x32xf32>
    %95 = arith.mulf %90, %94 : vector<8x32xf32>
    %96 = vector.shape_cast %6 : vector<32xf32> to vector<1x32xf32>
    %97 = vector.broadcast %96 : vector<1x32xf32> to vector<8x32xf32>
    %98 = arith.mulf %95, %97 : vector<8x32xf32>
    %99 = vector.shape_cast %8 : vector<32xf32> to vector<1x32xf32>
    %100 = vector.broadcast %99 : vector<1x32xf32> to vector<8x32xf32>
    %101 = arith.addf %98, %100 : vector<8x32xf32>
    %102 = arith.truncf %101 : vector<8x32xf32> to vector<8x32xbf16>
    %c0_40 = arith.constant 0 : index
    %c0_41 = arith.constant 0 : index
    %c0_42 = arith.constant 0 : index
    %103 = vector.load %arg3[%c0_40, %c0_41, %c0_42] : memref<1x32x128xbf16, #tpu.memory_space<vmem>>, vector<1x32x128xbf16>
    %104 = vector.shape_cast %103 : vector<1x32x128xbf16> to vector<32x128xbf16>
    %cst_43 = arith.constant dense<0.000000e+00> : vector<8x128xf32>
    %105 = tpu.matmul %102, %104, %cst_43 {dimension_numbers = #tpu.dot_dimension_numbers<[1], [0], [0], [1], [0, 0, 1, 1], [], []>} : vector<8x32xbf16>, vector<32x128xbf16>, vector<8x128xf32> -> vector<8x128xf32>
    %106 = vector.shape_cast %14 : vector<128xf32> to vector<1x128xf32>
    %107 = vector.broadcast %106 : vector<1x128xf32> to vector<8x128xf32>
    %108 = arith.addf %105, %107 : vector<8x128xf32>
    %cst_44 = arith.constant 5.000000e-01 : f32
    %109 = vector.broadcast %cst_44 : f32 to vector<8x128xf32>
    %110 = arith.mulf %109, %108 : vector<8x128xf32>
    %cst_45 = arith.constant 0.707106769 : f32
    %111 = vector.broadcast %cst_45 : f32 to vector<8x128xf32>
    %112 = arith.mulf %108, %111 : vector<8x128xf32>
    %113 = math.erf %112 : vector<8x128xf32>
    %cst_46 = arith.constant 1.000000e+00 : f32
    %114 = vector.broadcast %cst_46 : f32 to vector<8x128xf32>
    %115 = arith.addf %114, %113 : vector<8x128xf32>
    %116 = arith.mulf %110, %115 : vector<8x128xf32>
    %117 = arith.truncf %116 : vector<8x128xf32> to vector<8x128xbf16>
    %c0_47 = arith.constant 0 : index
    %c0_48 = arith.constant 0 : index
    %c0_49 = arith.constant 0 : index
    %118 = vector.load %arg4[%c0_47, %c0_48, %c0_49] : memref<1x128x32xbf16, #tpu.memory_space<vmem>>, vector<1x128x32xbf16>
    %119 = vector.shape_cast %118 : vector<1x128x32xbf16> to vector<128x32xbf16>
    %cst_50 = arith.constant dense<0.000000e+00> : vector<8x32xf32>
    %120 = tpu.matmul %117, %119, %cst_50 {dimension_numbers = #tpu.dot_dimension_numbers<[1], [0], [0], [1], [0, 0, 1, 1], [], []>} : vector<8x128xbf16>, vector<128x32xbf16>, vector<8x32xf32> -> vector<8x32xf32>
    %121 = vector.shape_cast %12 : vector<32xf32> to vector<1x32xf32>
    %122 = vector.broadcast %121 : vector<1x32xf32> to vector<8x32xf32>
    %123 = arith.addf %120, %122 : vector<8x32xf32>
    %124 = arith.addf %77, %123 : vector<8x32xf32>
    %c0_51 = arith.constant 0 : index
    %c0_52 = arith.constant 0 : index
    %125 = vector.load %arg7[%c0_51, %c0_52] : memref<8x32xf32, #tpu.memory_space<vmem>>, vector<8x32xf32>
    tpu.vector_store %arg7[%c0_51, %c0_52], %124 {strides = array<i32>} : memref<8x32xf32, #tpu.memory_space<vmem>>, vector<8x32xf32>,
    return
  }
  func.func @transform_0(%arg0: i32) -> (i32, i32) {
    %c0_i32 = arith.constant 0 : i32
    %c0_i32_0 = arith.constant 0 : i32
    return %arg0, %c0_i32 : i32, i32
  }
  func.func @transform_1(%arg0: i32) -> (i32, i32, i32) {
    %c0_i32 = arith.constant 0 : i32
    %c0_i32_0 = arith.constant 0 : i32
    %c0_i32_1 = arith.constant 0 : i32
    %c0_i32_2 = arith.constant 0 : i32
    return %c0_i32, %c0_i32_0, %c0_i32_1 : i32, i32, i32
  }
  func.func @transform_2(%arg0: i32) -> (i32, i32, i32) {
    %c0_i32 = arith.constant 0 : i32
    %c0_i32_0 = arith.constant 0 : i32
    %c0_i32_1 = arith.constant 0 : i32
    %c0_i32_2 = arith.constant 0 : i32
    return %c0_i32, %c0_i32_0, %c0_i32_1 : i32, i32, i32
  }
  func.func @transform_3(%arg0: i32) -> (i32, i32, i32) {
    %c0_i32 = arith.constant 0 : i32
    %c0_i32_0 = arith.constant 0 : i32
    %c0_i32_1 = arith.constant 0 : i32
    %c0_i32_2 = arith.constant 0 : i32
    return %c0_i32, %c0_i32_0, %c0_i32_1 : i32, i32, i32
  }
  func.func @transform_4(%arg0: i32) -> (i32, i32) {
    %c0_i32 = arith.constant 0 : i32
    %c0_i32_0 = arith.constant 0 : i32
    %c0_i32_1 = arith.constant 0 : i32
    return %c0_i32, %c0_i32_0 : i32, i32
  }
  func.func @transform_5(%arg0: i32) -> (i32, i32) {
    %c0_i32 = arith.constant 0 : i32
    %c0_i32_0 = arith.constant 0 : i32
    %c0_i32_1 = arith.constant 0 : i32
    return %c0_i32, %c0_i32_0 : i32, i32
  }
  func.func @transform_6(%arg0: i32) -> (i32, i32) {
    %c0_i32 = arith.constant 0 : i32
    %c0_i32_0 = arith.constant 0 : i32
    return %arg0, %c0_i32 : i32, i32
  }
}

</mosaic_0001>

<llo_original>
// kernel: tpu_custom_call.1
$region0: #{tpu_custom_call.1}
  #allocation0 [shape = 'u32[]', space=smem, size = 0x4, offset = 0x4, fixed_abs, tag = 'smem constant byte address 0x4 - core index']
  #allocation1 [shape = 'u32[144,128]{1,0:T(1,128)}', space=vmem, size = 0x12000, scoped, tag = 'internal scratch']
  %s0 = inlined_call_operand.vmem [shape: f32[16,32], index: 0, kind: input, shape index: {}]
  %s1 = inlined_call_operand.vmem [shape: bf16[4,32,32], index: 1, kind: input, shape index: {}]
  %s2 = inlined_call_operand.hbm [shape: bf16[1,32,128], index: 2, kind: input, shape index: {}]
  %s3 = inlined_call_operand.vmem [shape: bf16[1,128,32], index: 3, kind: input, shape index: {}]
  %s4 = inlined_call_operand.vmem [shape: f32[6,32], index: 4, kind: input, shape index: {}]
  %s5 = inlined_call_operand.vmem [shape: f32[1,128], index: 5, kind: input, shape index: {}]
  %s6 = inlined_call_operand.hbm [shape: f32[16,32], index: 6, kind: output, shape index: {}]
  %s7 = sld [smem:[#allocation0]]
  $region61: #{tpu_custom_call.1} parent=0
    _
  %s9 = ssub.s32 1, %s7
  %s10 = scalar_select 0, %s9, %s7
  $region1: #{tpu_custom_call.1} parent=0
    #allocation2 [shape = 'u8[8192]{0}', space=vmem, size = 0x2000, scoped, tag = 'input window, operand 2, single buffered']
    #allocation3 [shape = 's32[2]{0}', space=sflag, size = 0x8, scoped, tag = 'scoped memory for tpu_custom_call.1']
    #allocation4 [shape = 's32[2]{0}', space=sflag, size = 0x8, scoped, tag = 'scoped memory for tpu_custom_call.1']
    #allocation5 [shape = 'u8[8192]{0}', space=vmem, size = 0x2000, scoped, tag = 'output window, operand 0']
    %11 = vsyncpa [#allocation3], 0
    %12 = vsyncpa [#allocation4], 0
    %s13 = scalar_lea.sflag [#allocation4], 1
    %14 = vsyncpa %s13, 0
    loop: start=0, step=1, limit=4
    $region2: #{tpu_custom_call.1} parent=1 // loop_pre_header
      _
    $region3: #{tpu_custom_call.1} parent=1 // loop_header
      %s16 = sphi 0, %s20
      %p17 = scmp.ge.s32.totalorder %s16, 4
      %s26 = sphi 0, %s28
      %s29 = sphi 0, %s26
      %s30 = sphi 0, %s29
      %s46 = sphi 0, %s30
      %s50 = sphi 0, %s50
      %s52 = sphi 0, %s50
      %s53 = sphi 0, %s52
      %s67 = sphi 0, %s53
      %s71 = sphi 0, %s71
      %s73 = sphi 0, %s71
      %s74 = sphi 0, %s73
      %s88 = sphi 0, %s74
      %s92 = sphi 0, %s92
      %s94 = sphi 0, %s92
      %s95 = sphi 0, %s94
      %s109 = sphi 0, %s95
      %s113 = sphi 0, %s113
      %s115 = sphi 0, %s113
      %s116 = sphi 0, %s115
      %s130 = sphi 0, %s116
      %s134 = sphi 0, %s134
      %s136 = sphi 0, %s134
      %s137 = sphi 0, %s136
      %s151 = sphi 0, %s137
      %s157 = sphi 0, %s159
      %s160 = sphi 0, %s157
      %s161 = sphi 0, %s160
      %s177 = sphi 0, %s161
    $region4: #{tpu_custom_call.1} parent=1 // loop_header_branch
      %19 = sbr.rel (%p17) target = $region8
    $region5: #{tpu_custom_call.1} parent=1 // loop_body
      %s21 = ssub.s32 %s16, 1
      %s22 = ssub.s32 %s16, 2
      %s23 = sadd.s32 %s16, 1
      %s24 = ssub.s32 %s16, %s23
      %p25 = scmp.eq.s32.totalorder %s24, 0
      %s27 = sadd.s32 %s26, 1
      %s28 = scalar_select %p25, %s26, %s27
      %p31 = pneg %p25
      %p32 = scmp.eq.s32.totalorder %s16, 1
      %p33 = por %p31, %p32
      %p34 = scmp.ne.s32.totalorder %s26, %s29
      %p35 = scmp.eq.s32.totalorder %s16, 0
      %p36 = por %p34, %p35
      %p37 = scmp.ne.s32.totalorder %s26, %s29
      %p38 = scmp.eq.s32.totalorder %s21, 1
      %p39 = por %p37, %p38
      %p40 = scmp.ne.s32.totalorder %s29, %s30
      %p41 = scmp.eq.s32.totalorder %s21, 0
      %p42 = por %p40, %p41
      %p43 = scmp.ne.s32.totalorder %s29, %s30
      %p44 = scmp.eq.s32.totalorder %s22, 1
      %p45 = por %p43, %p44
      %p47 = scmp.ne.s32.totalorder %s30, %s46
      %p48 = scmp.eq.s32.totalorder %s22, 0
      %p49 = por %p47, %p48
      %s51 = sadd.s32 %s50, 1
      %p54 = scmp.eq.s32.totalorder %s16, 1
      %p55 = scmp.ne.s32.totalorder %s50, %s52
      %p56 = scmp.eq.s32.totalorder %s16, 0
      %p57 = por %p55, %p56
      %p58 = scmp.ne.s32.totalorder %s50, %s52
      %p59 = scmp.eq.s32.totalorder %s21, 1
      %p60 = por %p58, %p59
      %p61 = scmp.ne.s32.totalorder %s52, %s53
      %p62 = scmp.eq.s32.totalorder %s21, 0
      %p63 = por %p61, %p62
      %p64 = scmp.ne.s32.totalorder %s52, %s53
      %p65 = scmp.eq.s32.totalorder %s22, 1
      %p66 = por %p64, %p65
      %p68 = scmp.ne.s32.totalorder %s53, %s67
      %p69 = scmp.eq.s32.totalorder %s22, 0
      %p70 = por %p68, %p69
      %s72 = sadd.s32 %s71, 1
      %p75 = scmp.eq.s32.totalorder %s16, 1
      %p76 = scmp.ne.s32.totalorder %s71, %s73
      %p77 = scmp.eq.s32.totalorder %s16, 0
      %p78 = por %p76, %p77
      %p79 = scmp.ne.s32.totalorder %s71, %s73
      %p80 = scmp.eq.s32.totalorder %s21, 1
      %p81 = por %p79, %p80
      %p82 = scmp.ne.s32.totalorder %s73, %s74
      %p83 = scmp.eq.s32.totalorder %s21, 0
      %p84 = por %p82, %p83
      %p85 = scmp.ne.s32.totalorder %s73, %s74
      %p86 = scmp.eq.s32.totalorder %s22, 1
      %p87 = por %p85, %p86
      %p89 = scmp.ne.s32.totalorder %s74, %s88
      %p90 = scmp.eq.s32.totalorder %s22, 0
      %p91 = por %p89, %p90
      %s93 = sadd.s32 %s92, 1
      %p96 = scmp.eq.s32.totalorder %s16, 1
      %p97 = scmp.ne.s32.totalorder %s92, %s94
      %p98 = scmp.eq.s32.totalorder %s16, 0
      %p99 = por %p97, %p98
      %p100 = scmp.ne.s32.totalorder %s92, %s94
      %p101 = scmp.eq.s32.totalorder %s21, 1
      %p102 = por %p100, %p101
      %p103 = scmp.ne.s32.totalorder %s94, %s95
      %p104 = scmp.eq.s32.totalorder %s21, 0
      %p105 = por %p103, %p104
      %p106 = scmp.ne.s32.totalorder %s94, %s95
      %p107 = scmp.eq.s32.totalorder %s22, 1
      %p108 = por %p106, %p107
      %p110 = scmp.ne.s32.totalorder %s95, %s109
      %p111 = scmp.eq.s32.totalorder %s22, 0
      %p112 = por %p110, %p111
      %s114 = sadd.s32 %s113, 1
      %p117 = scmp.eq.s32.totalorder %s16, 1
      %p118 = scmp.ne.s32.totalorder %s113, %s115
      %p119 = scmp.eq.s32.totalorder %s16, 0
      %p120 = por %p118, %p119
      %p121 = scmp.ne.s32.totalorder %s113, %s115
      %p122 = scmp.eq.s32.totalorder %s21, 1
      %p123 = por %p121, %p122
      %p124 = scmp.ne.s32.totalorder %s115, %s116
      %p125 = scmp.eq.s32.totalorder %s21, 0
      %p126 = por %p124, %p125
      %p127 = scmp.ne.s32.totalorder %s115, %s116
      %p128 = scmp.eq.s32.totalorder %s22, 1
      %p129 = por %p127, %p128
      %p131 = scmp.ne.s32.totalorder %s116, %s130
      %p132 = scmp.eq.s32.totalorder %s22, 0
      %p133 = por %p131, %p132
      %s135 = sadd.s32 %s134, 1
      %p138 = scmp.eq.s32.totalorder %s16, 1
      %p139 = scmp.ne.s32.totalorder %s134, %s136
      %p140 = scmp.eq.s32.totalorder %s16, 0
      %p141 = por %p139, %p140
      %p142 = scmp.ne.s32.totalorder %s134, %s136
      %p143 = scmp.eq.s32.totalorder %s21, 1
      %p144 = por %p142, %p143
      %p145 = scmp.ne.s32.totalorder %s136, %s137
      %p146 = scmp.eq.s32.totalorder %s21, 0
      %p147 = por %p145, %p146
      %p148 = scmp.ne.s32.totalorder %s136, %s137
      %p149 = scmp.eq.s32.totalorder %s22, 1
      %p150 = por %p148, %p149
      %p152 = scmp.ne.s32.totalorder %s137, %s151
      %p153 = scmp.eq.s32.totalorder %s22, 0
      %p154 = por %p152, %p153
      %s155 = ssub.s32 %s16, %s23
      %p156 = scmp.eq.s32.totalorder %s155, 0
      %s158 = sadd.s32 %s157, 1
      %s159 = scalar_select %p156, %s157, %s158
      %p162 = pneg %p156
      %p163 = scmp.eq.s32.totalorder %s16, 1
      %p164 = por %p162, %p163
      %p165 = scmp.ne.s32.totalorder %s157, %s160
      %p166 = scmp.eq.s32.totalorder %s16, 0
      %p167 = por %p165, %p166
      %p168 = scmp.ne.s32.totalorder %s157, %s160
      %p169 = scmp.eq.s32.totalorder %s21, 1
      %p170 = por %p168, %p169
      %p171 = scmp.ne.s32.totalorder %s160, %s161
      %p172 = scmp.eq.s32.totalorder %s21, 0
      %p173 = por %p171, %p172
      %p174 = scmp.ne.s32.totalorder %s160, %s161
      %p175 = scmp.eq.s32.totalorder %s22, 1
      %p176 = por %p174, %p175
      %p178 = scmp.ne.s32.totalorder %s161, %s177
      %p179 = scmp.eq.s32.totalorder %s22, 0
      %p180 = por %p178, %p179
      %p181 = scmp.le.s32.totalorder 1, %s16
      %p182 = scmp.lt.s32.totalorder %s16, 3
      %p183 = pnand %p181, %p182
      %p184 = pneg %p183
      // Predicated region
      $region9: #{tpu_custom_call.1} parent=5 // pred_check
        _
      $region10: #{tpu_custom_call.1} parent=5 // pred_check_branch
        %186 = sbr.rel (%p183) target = $region12
      $region11: #{tpu_custom_call.1} parent=5 // pred_region
        %s187 = ssub.s32 %s16, 1
        // Predicated region
        $region13: #{tpu_custom_call.1} parent=11 // pred_check
          %p188 = pneg %p63
        $region14: #{tpu_custom_call.1} parent=11 // pred_check_branch
          %190 = sbr.rel (%p188) target = $region16
        $region15: #{tpu_custom_call.1} parent=11 // pred_region
          _
        $region16: #{tpu_custom_call.1} parent=11 // pred_fallthru
          _
        // Predicated region
        $region17: #{tpu_custom_call.1} parent=11 // pred_check
          %p191 = pneg %p84
        $region18: #{tpu_custom_call.1} parent=11 // pred_check_branch
          %193 = sbr.rel (%p191) target = $region20
        $region19: #{tpu_custom_call.1} parent=11 // pred_region
          %s195 = ssub.s32 256, 256
          %196 = vsyncadd [#allocation3], %s195
          %s197 = sshll.u32 [#allocation2], 4
          %s198 = int_to_ptr.vmem [resolvable:$true] %s197
          %203 = dma.hbm_to_vmem [thread:$0]  %s2, 256, %s198, [#allocation3], 64, 64, 4
        $region20: #{tpu_custom_call.1} parent=11 // pred_fallthru
          _
        // Predicated region
        $region21: #{tpu_custom_call.1} parent=11 // pred_check
          %p204 = pneg %p105
        $region22: #{tpu_custom_call.1} parent=11 // pred_check_branch
          %206 = sbr.rel (%p204) target = $region24
        $region23: #{tpu_custom_call.1} parent=11 // pred_region
          _
        $region24: #{tpu_custom_call.1} parent=11 // pred_fallthru
          _
        // Predicated region
        $region25: #{tpu_custom_call.1} parent=11 // pred_check
          %p207 = pneg %p126
        $region26: #{tpu_custom_call.1} parent=11 // pred_check_branch
          %209 = sbr.rel (%p207) target = $region28
        $region27: #{tpu_custom_call.1} parent=11 // pred_region
          _
        $region28: #{tpu_custom_call.1} parent=11 // pred_fallthru
          _
        // Predicated region
        $region29: #{tpu_custom_call.1} parent=11 // pred_check
          %p210 = pneg %p147
        $region30: #{tpu_custom_call.1} parent=11 // pred_check_branch
          %212 = sbr.rel (%p210) target = $region32
        $region31: #{tpu_custom_call.1} parent=11 // pred_region
          _
        $region32: #{tpu_custom_call.1} parent=11 // pred_fallthru
          _
      $region12: #{tpu_custom_call.1} parent=5 // pred_fallthru
        _
      %p213 = scmp.lt.s32.totalorder %s16, 2
      // Predicated region
      $region33: #{tpu_custom_call.1} parent=5 // pred_check
        %p214 = pneg %p213
      $region34: #{tpu_custom_call.1} parent=5 // pred_check_branch
        %216 = sbr.rel (%p214) target = $region36
      $region35: #{tpu_custom_call.1} parent=5 // pred_region
        // Predicated region
        $region37: #{tpu_custom_call.1} parent=35 // pred_check
          %p217 = pneg %p36
        $region38: #{tpu_custom_call.1} parent=35 // pred_check_branch
          %219 = sbr.rel (%p217) target = $region40
        $region39: #{tpu_custom_call.1} parent=35 // pred_region
          %p220 = scmp.lt.s32.totalorder %s16, 1
          %s221 = scalar_select %p220, %s16, 1
          %s222 = smul.addr %s221, 8
          %s223 = scalar_lea.vmem %s0, %s222
        $region40: #{tpu_custom_call.1} parent=35 // pred_fallthru
          _
      $region36: #{tpu_custom_call.1} parent=5 // pred_fallthru
        _
      %p224 = scmp.le.s32.totalorder 1, %s16
      %p225 = scmp.lt.s32.totalorder %s16, 3
      %p226 = pnand %p224, %p225
      %p227 = pneg %p226
      // Predicated region
      $region41: #{tpu_custom_call.1} parent=5 // pred_check
        _
      $region42: #{tpu_custom_call.1} parent=5 // pred_check_branch
        %229 = sbr.rel (%p226) target = $region44
      $region43: #{tpu_custom_call.1} parent=5 // pred_region
        %s230 = ssub.s32 %s16, 1
        // Predicated region
        $region45: #{tpu_custom_call.1} parent=43 // pred_check
          %p231 = pneg %p84
        $region46: #{tpu_custom_call.1} parent=43 // pred_check_branch
          %233 = sbr.rel (%p231) target = $region48
        $region47: #{tpu_custom_call.1} parent=43 // pred_region
          %234 = dma.done [#allocation3], 256
        $region48: #{tpu_custom_call.1} parent=43 // pred_fallthru
          _
        %p235 = scmp.lt.s32.totalorder %s21, 1
        %s236 = scalar_select %p235, %s21, 1
        %s237 = smul.addr %s236, 8
        %s238 = scalar_lea.vmem %s0, %s237
        %p239 = pneg %p42
        %p240 = pneg %p39
        %p241 = pneg %p63
        %p242 = pneg %p60
        %p243 = pneg %p84
        %p244 = pneg %p81
        %p245 = pneg %p105
        %p246 = pneg %p102
        %p247 = pneg %p126
        %p248 = pneg %p123
        %p249 = pneg %p147
        %p250 = pneg %p144
        %p251 = pneg %p173
        %p252 = pneg %p170
        %s253 = sand.u32 %s160, 1
        %s254 = scalar_lea.sflag [#allocation4], %s253
        %s255 = sand.u32 %s160, 1
        %s256 = smul.addr %s255, 8
        %s257 = scalar_lea.vmem [#allocation5], %s256
        %p258 = scmp.lt.s32.totalorder %s21, 1
        %s259 = scalar_select %p258, %s21, 1
        %s260 = smul.addr %s259, 8
        %s261 = scalar_lea.vmem %s0, %s260
        %v263 = vld [vmem:[%s261] sm:$0xff]
        %v264 = vld [vmem:[%s4] sm:$0x1]
        %v265 = vld [vmem:[%s4 + $0x1] sm:$0x1]
        %v266 = vld [vmem:[%s4 + $0x2] sm:$0x1]
        %v267 = vld [vmem:[%s4 + $0x3] sm:$0x1]
        %v268 = vld [vmem:[%s4 + $0x4] sm:$0x1]
        %v269 = vld [vmem:[%s4 + $0x5] sm:$0x1]
        %v270 = vld [vmem:[%s5] sm:$0x1]
        %vm271 = vcmask 261120
        %v272 = vsel %vm271, %v263, 0.0
        %273 = vadd.xlane.f32.xlu0 %v272
        %v274 = vpop.xlane.xlu0 %273
        %v275 = vrcp.pop 32.0
        %v276 = vmul.f32 %v274, %v275
        %v277 = vsub.f32 %v263, %v276
        %v278 = vmul.f32 %v277, %v277
        %v279 = vsel %vm271, %v278, 0.0
        %280 = vadd.xlane.f32.xlu0 %v279
        %v281 = vpop.xlane.xlu0 %280
        %v282 = vmul.f32 %v281, %v275
        %v283 = vadd.f32 %v282, 1e-05
        %v284 = vrsqrt.pop %v283
        %v285 = vmul.f32 %v277, %v284
        %v286 = vlaneseq
        %v287 = vshrl.u32 %v286, 7
        %v288 = vsub.s32 0, %v287
        %v289 = vrot.slane %v264, %v288
        %v290 = vmul.f32 %v285, %v289
        %v291 = vlaneseq
        %v292 = vshrl.u32 %v291, 7
        %v293 = vsub.s32 0, %v292
        %v294 = vrot.slane %v265, %v293
        %v295 = vadd.f32 %v290, %v294
        %v296 = vpack.c.bf16 %v295, %v295
        %v297 = vld [vmem:[%s1] sm:$0xf]
        %v298 = vld [vmem:[%s1 + $0x4] sm:$0xf]
        %v299 = vld [vmem:[%s1 + $0x8] sm:$0xf]
        %v300 = vld [vmem:[%s1 + $0xc] sm:$0xf]
        %v305 = vunpack.c.l.b16 %v297
        %v306 = vunpack.c.l.b16 %v298
        %v307 = vunpack.c.l.b16 %v299
        %v308 = vunpack.c.l.b16 %v300
        %v309 = vpack.c.b16 %v306, %v305
        %v310 = vpack.c.b16 %v308, %v307
        %v314 = vsel %vm271, %v296, 0
        %316 = vmatprep.subr.bf16.mxu0 0
        %317 = vmatpush1.bf16.msra.mxu0 %v309
        %318 = vmatprep.subr.bf16.mxu0 0
        %319 = vmatpush1.bf16.msra.mxu0 %v310
        %320 = vmatprep.subr.bf16.mxu0 0
        %321 = vmatpush1.bf16.msra.mxu0 0
        %322 = vmatprep.subr.bf16.mxu0 0
        %323 = vmatpush1.bf16.msra.mxu0 0
        %324 = vmatprep.subr.bf16.mxu0 0
        %325 = vmatpush1.bf16.msra.mxu0 0
        %326 = vmatprep.subr.bf16.mxu0 0
        %327 = vmatpush1.bf16.msra.mxu0 0
        %328 = vmatprep.subr.bf16.mxu0 0
        %329 = vmatpush1.bf16.msra.mxu0 0
        %330 = vmatprep.subr.bf16.mxu0 0
        %331 = vmatpush1.bf16.msra.mxu0 0
        %332 = vmatprep.subr.bf16.mxu0 0
        %333 = vmatpush1.bf16.msra.mxu0 0
        %334 = vmatprep.subr.bf16.mxu0 0
        %335 = vmatpush1.bf16.msra.mxu0 0
        %336 = vmatprep.subr.bf16.mxu0 0
        %337 = vmatpush1.bf16.msra.mxu0 0
        %338 = vmatprep.subr.bf16.mxu0 0
        %339 = vmatpush1.bf16.msra.mxu0 0
        %340 = vmatprep.subr.bf16.mxu0 0
        %341 = vmatpush1.bf16.msra.mxu0 0
        %342 = vmatprep.subr.bf16.mxu0 0
        %343 = vmatpush1.bf16.msra.mxu0 0
        %344 = vmatprep.subr.bf16.mxu0 0
        %345 = vmatpush1.bf16.msra.mxu0 0
        %346 = vmatprep.subr.bf16.mxu0 0
        %347 = vmatpush1.bf16.msra.mxu0 0
        %348 = vmatprep.mubr.bf16.mxu0 0
        %349 = vmatmul.mubr.bf16.gmra.mrb[0].mxu0 %v314
        %v350 = vpop.f32.mrb[0].mxu0
        %v351 = vadd.f32 0.0, %v350
        %v352 = vpop.f32.mrb[0].mxu0
        %v353 = vpop.f32.mrb[0].mxu0
        %v354 = vpop.f32.mrb[0].mxu0
        %355 = vdwg.mxu0
        %s356 = scalar_lea.vmem %s1, 16
        %v357 = vld [vmem:[%s356] sm:$0xf]
        %v358 = vld [vmem:[%s356 + $0x4] sm:$0xf]
        %v359 = vld [vmem:[%s356 + $0x8] sm:$0xf]
        %v360 = vld [vmem:[%s356 + $0xc] sm:$0xf]
        %v365 = vunpack.c.l.b16 %v357
        %v366 = vunpack.c.l.b16 %v358
        %v367 = vunpack.c.l.b16 %v359
        %v368 = vunpack.c.l.b16 %v360
        %v369 = vpack.c.b16 %v366, %v365
        %v370 = vpack.c.b16 %v368, %v367
        %373 = vmatprep.subr.bf16.mxu0 0
        %374 = vmatpush1.bf16.msra.mxu0 %v369
        %375 = vmatprep.subr.bf16.mxu0 0
        %376 = vmatpush1.bf16.msra.mxu0 %v370
        %377 = vmatprep.subr.bf16.mxu0 0
        %378 = vmatpush1.bf16.msra.mxu0 0
        %379 = vmatprep.subr.bf16.mxu0 0
        %380 = vmatpush1.bf16.msra.mxu0 0
        %381 = vmatprep.subr.bf16.mxu0 0
        %382 = vmatpush1.bf16.msra.mxu0 0
        %383 = vmatprep.subr.bf16.mxu0 0
        %384 = vmatpush1.bf16.msra.mxu0 0
        %385 = vmatprep.subr.bf16.mxu0 0
        %386 = vmatpush1.bf16.msra.mxu0 0
        %387 = vmatprep.subr.bf16.mxu0 0
        %388 = vmatpush1.bf16.msra.mxu0 0
        %389 = vmatprep.subr.bf16.mxu0 0
        %390 = vmatpush1.bf16.msra.mxu0 0
        %391 = vmatprep.subr.bf16.mxu0 0
        %392 = vmatpush1.bf16.msra.mxu0 0
        %393 = vmatprep.subr.bf16.mxu0 0
        %394 = vmatpush1.bf16.msra.mxu0 0
        %395 = vmatprep.subr.bf16.mxu0 0
        %396 = vmatpush1.bf16.msra.mxu0 0
        %397 = vmatprep.subr.bf16.mxu0 0
        %398 = vmatpush1.bf16.msra.mxu0 0
        %399 = vmatprep.subr.bf16.mxu0 0
        %400 = vmatpush1.bf16.msra.mxu0 0
        %401 = vmatprep.subr.bf16.mxu0 0
        %402 = vmatpush1.bf16.msra.mxu0 0
        %403 = vmatprep.subr.bf16.mxu0 0
        %404 = vmatpush1.bf16.msra.mxu0 0
        %405 = vmatprep.mubr.bf16.mxu0 0
        %406 = vmatmul.mubr.bf16.gmra.mrb[0].mxu0 %v314
        %v407 = vpop.f32.mrb[0].mxu0
        %v408 = vadd.f32 0.0, %v407
        %v409 = vpop.f32.mrb[0].mxu0
        %v410 = vpop.f32.mrb[0].mxu0
        %v411 = vpop.f32.mrb[0].mxu0
        %412 = vdwg.mxu0
        %s413 = scalar_lea.vmem %s1, 32
        %v414 = vld [vmem:[%s413] sm:$0xf]
        %v415 = vld [vmem:[%s413 + $0x4] sm:$0xf]
        %v416 = vld [vmem:[%s413 + $0x8] sm:$0xf]
        %v417 = vld [vmem:[%s413 + $0xc] sm:$0xf]
        %v422 = vunpack.c.l.b16 %v414
        %v423 = vunpack.c.l.b16 %v415
        %v424 = vunpack.c.l.b16 %v416
        %v425 = vunpack.c.l.b16 %v417
        %v426 = vpack.c.b16 %v423, %v422
        %v427 = vpack.c.b16 %v425, %v424
        %430 = vmatprep.subr.bf16.mxu0 0
        %431 = vmatpush1.bf16.msra.mxu0 %v426
        %432 = vmatprep.subr.bf16.mxu0 0
        %433 = vmatpush1.bf16.msra.mxu0 %v427
        %434 = vmatprep.subr.bf16.mxu0 0
        %435 = vmatpush1.bf16.msra.mxu0 0
        %436 = vmatprep.subr.bf16.mxu0 0
        %437 = vmatpush1.bf16.msra.mxu0 0
        %438 = vmatprep.subr.bf16.mxu0 0
        %439 = vmatpush1.bf16.msra.mxu0 0
        %440 = vmatprep.subr.bf16.mxu0 0
        %441 = vmatpush1.bf16.msra.mxu0 0
        %442 = vmatprep.subr.bf16.mxu0 0
        %443 = vmatpush1.bf16.msra.mxu0 0
        %444 = vmatprep.subr.bf16.mxu0 0
        %445 = vmatpush1.bf16.msra.mxu0 0
        %446 = vmatprep.subr.bf16.mxu0 0
        %447 = vmatpush1.bf16.msra.mxu0 0
        %448 = vmatprep.subr.bf16.mxu0 0
        %449 = vmatpush1.bf16.msra.mxu0 0
        %450 = vmatprep.subr.bf16.mxu0 0
        %451 = vmatpush1.bf16.msra.mxu0 0
        %452 = vmatprep.subr.bf16.mxu0 0
        %453 = vmatpush1.bf16.msra.mxu0 0
        %454 = vmatprep.subr.bf16.mxu0 0
        %455 = vmatpush1.bf16.msra.mxu0 0
        %456 = vmatprep.subr.bf16.mxu0 0
        %457 = vmatpush1.bf16.msra.mxu0 0
        %458 = vmatprep.subr.bf16.mxu0 0
        %459 = vmatpush1.bf16.msra.mxu0 0
        %460 = vmatprep.subr.bf16.mxu0 0
        %461 = vmatpush1.bf16.msra.mxu0 0
        %462 = vmatprep.mubr.bf16.mxu0 0
        %463 = vmatmul.mubr.bf16.gmra.mrb[0].mxu0 %v314
        %v464 = vpop.f32.mrb[0].mxu0
        %v465 = vadd.f32 0.0, %v464
        %v466 = vpop.f32.mrb[0].mxu0
        %v467 = vpop.f32.mrb[0].mxu0
        %v468 = vpop.f32.mrb[0].mxu0
        %469 = vdwg.mxu0
        %471 = vrot.lane.b32.xlu0 %v351, 120
        %v472 = vpop.permute.xlu0 %471
        %474 = vrot.lane.b32.xlu0 %v351, 112
        %v475 = vpop.permute.xlu0 %474
        %477 = vrot.lane.b32.xlu0 %v351, 104
        %v478 = vpop.permute.xlu0 %477
        %v480 = vcombine.low %v351, %v475
        %v481 = vcombine.high %v351, %v475
        %v483 = vunpack.c.l.s4 1983009808
        %v484 = vunpack.c.0.s8 %v483
        %v485 = vlaneseq
        %v486 = vshrl.u32 %v485, 7
        %v487 = vsub.s32 %v484, %v486
        %v488 = vrot.slane %v480, %v487
        %v490 = vunpack.c.l.s4 1983009808
        %v491 = vunpack.c.0.s8 %v490
        %v492 = vlaneseq
        %v493 = vshrl.u32 %v492, 7
        %v494 = vsub.s32 %v491, %v493
        %v495 = vrot.slane %v481, %v494
        %v496 = vcombine.low %v472, %v478
        %v497 = vcombine.high %v472, %v478
        %v499 = vunpack.c.l.s4 1983009808
        %v500 = vunpack.c.0.s8 %v499
        %v501 = vlaneseq
        %v502 = vshrl.u32 %v501, 7
        %v503 = vsub.s32 %v500, %v502
        %v504 = vrot.slane %v496, %v503
        %v506 = vunpack.c.l.s4 1983009808
        %v507 = vunpack.c.0.s8 %v506
        %v508 = vlaneseq
        %v509 = vshrl.u32 %v508, 7
        %v510 = vsub.s32 %v507, %v509
        %v511 = vrot.slane %v497, %v510
        %v512 = vcombine.low %v488, %v504
        %v513 = vcombine.high %v488, %v504
        %v515 = vunpack.c.l.s4 1934713408
        %v516 = vunpack.c.0.s8 %v515
        %v517 = vlaneseq
        %v518 = vshrl.u32 %v517, 7
        %v519 = vsub.s32 %v516, %v518
        %v520 = vrot.slane %v512, %v519
        %v522 = vunpack.c.l.s4 1934713408
        %v523 = vunpack.c.0.s8 %v522
        %v524 = vlaneseq
        %v525 = vshrl.u32 %v524, 7
        %v526 = vsub.s32 %v523, %v525
        %v527 = vrot.slane %v513, %v526
        %v528 = vcombine.low %v495, %v511
        %v529 = vcombine.high %v495, %v511
        %v531 = vunpack.c.l.s4 1934713408
        %v532 = vunpack.c.0.s8 %v531
        %v533 = vlaneseq
        %v534 = vshrl.u32 %v533, 7
        %v535 = vsub.s32 %v532, %v534
        %v536 = vrot.slane %v528, %v535
        %v538 = vunpack.c.l.s4 1934713408
        %v539 = vunpack.c.0.s8 %v538
        %v540 = vlaneseq
        %v541 = vshrl.u32 %v540, 7
        %v542 = vsub.s32 %v539, %v541
        %v543 = vrot.slane %v529, %v542
        %v544 = vcombine.high %v520, 0.0
        %v545 = vcombine.high %v527, 0.0
        %v546 = vcombine.high %v536, 0.0
        %v547 = vcombine.high %v543, 0.0
        %v548 = vcombine.low %v520, %v527
        %v550 = vunpack.c.l.s4 1983009808
        %v551 = vunpack.c.0.s8 %v550
        %v552 = vlaneseq
        %v553 = vshrl.u32 %v552, 7
        %v554 = vsub.s32 %v551, %v553
        %v555 = vrot.slane %v548, %v554
        %v556 = vcombine.low %v544, %v545
        %v558 = vunpack.c.l.s4 1983009808
        %v559 = vunpack.c.0.s8 %v558
        %v560 = vlaneseq
        %v561 = vshrl.u32 %v560, 7
        %v562 = vsub.s32 %v559, %v561
        %v563 = vrot.slane %v556, %v562
        %v564 = vcombine.low %v536, %v543
        %v566 = vunpack.c.l.s4 1983009808
        %v567 = vunpack.c.0.s8 %v566
        %v568 = vlaneseq
        %v569 = vshrl.u32 %v568, 7
        %v570 = vsub.s32 %v567, %v569
        %v571 = vrot.slane %v564, %v570
        %v572 = vcombine.low %v546, %v547
        %v574 = vunpack.c.l.s4 1983009808
        %v575 = vunpack.c.0.s8 %v574
        %v576 = vlaneseq
        %v577 = vshrl.u32 %v576, 7
        %v578 = vsub.s32 %v575, %v577
        %v579 = vrot.slane %v572, %v578
        %v580 = vcombine.low %v555, %v563
        %v581 = vcombine.high %v555, %v563
        %v583 = vunpack.c.l.s4 1934713408
        %v584 = vunpack.c.0.s8 %v583
        %v585 = vlaneseq
        %v586 = vshrl.u32 %v585, 7
        %v587 = vsub.s32 %v584, %v586
        %v588 = vrot.slane %v580, %v587
        %v590 = vunpack.c.l.s4 1934713408
        %v591 = vunpack.c.0.s8 %v590
        %v592 = vlaneseq
        %v593 = vshrl.u32 %v592, 7
        %v594 = vsub.s32 %v591, %v593
        %v595 = vrot.slane %v581, %v594
        %v596 = vcombine.low %v571, %v579
        %v597 = vcombine.high %v571, %v579
        %v599 = vunpack.c.l.s4 1934713408
        %v600 = vunpack.c.0.s8 %v599
        %v601 = vlaneseq
        %v602 = vshrl.u32 %v601, 7
        %v603 = vsub.s32 %v600, %v602
        %v604 = vrot.slane %v596, %v603
        %v606 = vunpack.c.l.s4 1934713408
        %v607 = vunpack.c.0.s8 %v606
        %v608 = vlaneseq
        %v609 = vshrl.u32 %v608, 7
        %v610 = vsub.s32 %v607, %v609
        %v611 = vrot.slane %v597, %v610
        %v612 = vcombine.low %v588, %v604
        %v613 = vcombine.high %v588, %v604
        %v614 = vcombine.low %v595, %v611
        %v615 = vcombine.high %v595, %v611
        %617 = vrot.lane.b32.xlu0 %v408, 120
        %v618 = vpop.permute.xlu0 %617
        %620 = vrot.lane.b32.xlu0 %v408, 112
        %v621 = vpop.permute.xlu0 %620
        %623 = vrot.lane.b32.xlu0 %v408, 104
        %v624 = vpop.permute.xlu0 %623
        %v626 = vcombine.low %v408, %v621
        %v627 = vcombine.high %v408, %v621
        %v629 = vunpack.c.l.s4 1983009808
        %v630 = vunpack.c.0.s8 %v629
        %v631 = vlaneseq
        %v632 = vshrl.u32 %v631, 7
        %v633 = vsub.s32 %v630, %v632
        %v634 = vrot.slane %v626, %v633
        %v636 = vunpack.c.l.s4 1983009808
        %v637 = vunpack.c.0.s8 %v636
        %v638 = vlaneseq
        %v639 = vshrl.u32 %v638, 7
        %v640 = vsub.s32 %v637, %v639
        %v641 = vrot.slane %v627, %v640
        %v642 = vcombine.low %v618, %v624
        %v643 = vcombine.high %v618, %v624
        %v645 = vunpack.c.l.s4 1983009808
        %v646 = vunpack.c.0.s8 %v645
        %v647 = vlaneseq
        %v648 = vshrl.u32 %v647, 7
        %v649 = vsub.s32 %v646, %v648
        %v650 = vrot.slane %v642, %v649
        %v652 = vunpack.c.l.s4 1983009808
        %v653 = vunpack.c.0.s8 %v652
        %v654 = vlaneseq
        %v655 = vshrl.u32 %v654, 7
        %v656 = vsub.s32 %v653, %v655
        %v657 = vrot.slane %v643, %v656
        %v658 = vcombine.low %v634, %v650
        %v659 = vcombine.high %v634, %v650
        %v661 = vunpack.c.l.s4 1934713408
        %v662 = vunpack.c.0.s8 %v661
        %v663 = vlaneseq
        %v664 = vshrl.u32 %v663, 7
        %v665 = vsub.s32 %v662, %v664
        %v666 = vrot.slane %v658, %v665
        %v668 = vunpack.c.l.s4 1934713408
        %v669 = vunpack.c.0.s8 %v668
        %v670 = vlaneseq
        %v671 = vshrl.u32 %v670, 7
        %v672 = vsub.s32 %v669, %v671
        %v673 = vrot.slane %v659, %v672
        %v674 = vcombine.low %v641, %v657
        %v675 = vcombine.high %v641, %v657
        %v677 = vunpack.c.l.s4 1934713408
        %v678 = vunpack.c.0.s8 %v677
        %v679 = vlaneseq
        %v680 = vshrl.u32 %v679, 7
        %v681 = vsub.s32 %v678, %v680
        %v682 = vrot.slane %v674, %v681
        %v684 = vunpack.c.l.s4 1934713408
        %v685 = vunpack.c.0.s8 %v684
        %v686 = vlaneseq
        %v687 = vshrl.u32 %v686, 7
        %v688 = vsub.s32 %v685, %v687
        %v689 = vrot.slane %v675, %v688
        %v690 = vcombine.high %v666, 0.0
        %v691 = vcombine.high %v673, 0.0
        %v692 = vcombine.high %v682, 0.0
        %v693 = vcombine.high %v689, 0.0
        %v694 = vcombine.low %v666, %v673
        %v696 = vunpack.c.l.s4 1983009808
        %v697 = vunpack.c.0.s8 %v696
        %v698 = vlaneseq
        %v699 = vshrl.u32 %v698, 7
        %v700 = vsub.s32 %v697, %v699
        %v701 = vrot.slane %v694, %v700
        %v702 = vcombine.low %v690, %v691
        %v704 = vunpack.c.l.s4 1983009808
        %v705 = vunpack.c.0.s8 %v704
        %v706 = vlaneseq
        %v707 = vshrl.u32 %v706, 7
        %v708 = vsub.s32 %v705, %v707
        %v709 = vrot.slane %v702, %v708
        %v710 = vcombine.low %v682, %v689
        %v712 = vunpack.c.l.s4 1983009808
        %v713 = vunpack.c.0.s8 %v712
        %v714 = vlaneseq
        %v715 = vshrl.u32 %v714, 7
        %v716 = vsub.s32 %v713, %v715
        %v717 = vrot.slane %v710, %v716
        %v718 = vcombine.low %v692, %v693
        %v720 = vunpack.c.l.s4 1983009808
        %v721 = vunpack.c.0.s8 %v720
        %v722 = vlaneseq
        %v723 = vshrl.u32 %v722, 7
        %v724 = vsub.s32 %v721, %v723
        %v725 = vrot.slane %v718, %v724
        %v726 = vcombine.low %v701, %v709
        %v727 = vcombine.high %v701, %v709
        %v729 = vunpack.c.l.s4 1934713408
        %v730 = vunpack.c.0.s8 %v729
        %v731 = vlaneseq
        %v732 = vshrl.u32 %v731, 7
        %v733 = vsub.s32 %v730, %v732
        %v734 = vrot.slane %v726, %v733
        %v736 = vunpack.c.l.s4 1934713408
        %v737 = vunpack.c.0.s8 %v736
        %v738 = vlaneseq
        %v739 = vshrl.u32 %v738, 7
        %v740 = vsub.s32 %v737, %v739
        %v741 = vrot.slane %v727, %v740
        %v742 = vcombine.low %v717, %v725
        %v743 = vcombine.high %v717, %v725
        %v745 = vunpack.c.l.s4 1934713408
        %v746 = vunpack.c.0.s8 %v745
        %v747 = vlaneseq
        %v748 = vshrl.u32 %v747, 7
        %v749 = vsub.s32 %v746, %v748
        %v750 = vrot.slane %v742, %v749
        %v752 = vunpack.c.l.s4 1934713408
        %v753 = vunpack.c.0.s8 %v752
        %v754 = vlaneseq
        %v755 = vshrl.u32 %v754, 7
        %v756 = vsub.s32 %v753, %v755
        %v757 = vrot.slane %v743, %v756
        %v758 = vcombine.low %v734, %v750
        %v759 = vcombine.high %v734, %v750
        %v760 = vcombine.low %v741, %v757
        %v761 = vcombine.high %v741, %v757
        %763 = vrot.lane.b32.xlu0 %v465, 120
        %v764 = vpop.permute.xlu0 %763
        %766 = vrot.lane.b32.xlu0 %v465, 112
        %v767 = vpop.permute.xlu0 %766
        %769 = vrot.lane.b32.xlu0 %v465, 104
        %v770 = vpop.permute.xlu0 %769
        %v772 = vcombine.low %v465, %v767
        %v773 = vcombine.high %v465, %v767
        %v775 = vunpack.c.l.s4 1983009808
        %v776 = vunpack.c.0.s8 %v775
        %v777 = vlaneseq
        %v778 = vshrl.u32 %v777, 7
        %v779 = vsub.s32 %v776, %v778
        %v780 = vrot.slane %v772, %v779
        %v782 = vunpack.c.l.s4 1983009808
        %v783 = vunpack.c.0.s8 %v782
        %v784 = vlaneseq
        %v785 = vshrl.u32 %v784, 7
        %v786 = vsub.s32 %v783, %v785
        %v787 = vrot.slane %v773, %v786
        %v788 = vcombine.low %v764, %v770
        %v789 = vcombine.high %v764, %v770
        %v791 = vunpack.c.l.s4 1983009808
        %v792 = vunpack.c.0.s8 %v791
        %v793 = vlaneseq
        %v794 = vshrl.u32 %v793, 7
        %v795 = vsub.s32 %v792, %v794
        %v796 = vrot.slane %v788, %v795
        %v798 = vunpack.c.l.s4 1983009808
        %v799 = vunpack.c.0.s8 %v798
        %v800 = vlaneseq
        %v801 = vshrl.u32 %v800, 7
        %v802 = vsub.s32 %v799, %v801
        %v803 = vrot.slane %v789, %v802
        %v804 = vcombine.low %v780, %v796
        %v805 = vcombine.high %v780, %v796
        %v807 = vunpack.c.l.s4 1934713408
        %v808 = vunpack.c.0.s8 %v807
        %v809 = vlaneseq
        %v810 = vshrl.u32 %v809, 7
        %v811 = vsub.s32 %v808, %v810
        %v812 = vrot.slane %v804, %v811
        %v814 = vunpack.c.l.s4 1934713408
        %v815 = vunpack.c.0.s8 %v814
        %v816 = vlaneseq
        %v817 = vshrl.u32 %v816, 7
        %v818 = vsub.s32 %v815, %v817
        %v819 = vrot.slane %v805, %v818
        %v820 = vcombine.low %v787, %v803
        %v821 = vcombine.high %v787, %v803
        %v823 = vunpack.c.l.s4 1934713408
        %v824 = vunpack.c.0.s8 %v823
        %v825 = vlaneseq
        %v826 = vshrl.u32 %v825, 7
        %v827 = vsub.s32 %v824, %v826
        %v828 = vrot.slane %v820, %v827
        %v830 = vunpack.c.l.s4 1934713408
        %v831 = vunpack.c.0.s8 %v830
        %v832 = vlaneseq
        %v833 = vshrl.u32 %v832, 7
        %v834 = vsub.s32 %v831, %v833
        %v835 = vrot.slane %v821, %v834
        %v836 = vcombine.high %v812, 0.0
        %v837 = vcombine.high %v819, 0.0
        %v838 = vcombine.high %v828, 0.0
        %v839 = vcombine.high %v835, 0.0
        %v840 = vcombine.low %v812, %v819
        %v842 = vunpack.c.l.s4 1983009808
        %v843 = vunpack.c.0.s8 %v842
        %v844 = vlaneseq
        %v845 = vshrl.u32 %v844, 7
        %v846 = vsub.s32 %v843, %v845
        %v847 = vrot.slane %v840, %v846
        %v848 = vcombine.low %v836, %v837
        %v850 = vunpack.c.l.s4 1983009808
        %v851 = vunpack.c.0.s8 %v850
        %v852 = vlaneseq
        %v853 = vshrl.u32 %v852, 7
        %v854 = vsub.s32 %v851, %v853
        %v855 = vrot.slane %v848, %v854
        %v856 = vcombine.low %v828, %v835
        %v858 = vunpack.c.l.s4 1983009808
        %v859 = vunpack.c.0.s8 %v858
        %v860 = vlaneseq
        %v861 = vshrl.u32 %v860, 7
        %v862 = vsub.s32 %v859, %v861
        %v863 = vrot.slane %v856, %v862
        %v864 = vcombine.low %v838, %v839
        %v866 = vunpack.c.l.s4 1983009808
        %v867 = vunpack.c.0.s8 %v866
        %v868 = vlaneseq
        %v869 = vshrl.u32 %v868, 7
        %v870 = vsub.s32 %v867, %v869
        %v871 = vrot.slane %v864, %v870
        %v872 = vcombine.low %v847, %v855
        %v873 = vcombine.high %v847, %v855
        %v875 = vunpack.c.l.s4 1934713408
        %v876 = vunpack.c.0.s8 %v875
        %v877 = vlaneseq
        %v878 = vshrl.u32 %v877, 7
        %v879 = vsub.s32 %v876, %v878
        %v880 = vrot.slane %v872, %v879
        %v882 = vunpack.c.l.s4 1934713408
        %v883 = vunpack.c.0.s8 %v882
        %v884 = vlaneseq
        %v885 = vshrl.u32 %v884, 7
        %v886 = vsub.s32 %v883, %v885
        %v887 = vrot.slane %v873, %v886
        %v888 = vcombine.low %v863, %v871
        %v889 = vcombine.high %v863, %v871
        %v891 = vunpack.c.l.s4 1934713408
        %v892 = vunpack.c.0.s8 %v891
        %v893 = vlaneseq
        %v894 = vshrl.u32 %v893, 7
        %v895 = vsub.s32 %v892, %v894
        %v896 = vrot.slane %v888, %v895
        %v898 = vunpack.c.l.s4 1934713408
        %v899 = vunpack.c.0.s8 %v898
        %v900 = vlaneseq
        %v901 = vshrl.u32 %v900, 7
        %v902 = vsub.s32 %v899, %v901
        %v903 = vrot.slane %v889, %v902
        %v904 = vcombine.low %v880, %v896
        %v905 = vcombine.high %v880, %v896
        %v906 = vcombine.low %v887, %v903
        %v907 = vcombine.high %v887, %v903
        %vm908 = vcmask 64512
        %v910 = vsel %vm908, %v612, 0
        %v913 = vsel %vm908, %v758, 0
        %915 = vmatprep.subr.mxu0 0.0
        %916 = vmatpush1.xpose.msra.mxu0 %v913
        %917 = vmatprep.subr.mxu0 0.0
        %918 = vmatpush1.xpose.msra.mxu0 0.0
        %919 = vmatprep.subr.mxu0 0.0
        %920 = vmatpush1.xpose.msra.mxu0 0.0
        %921 = vmatprep.subr.mxu0 0.0
        %922 = vmatpush1.xpose.msra.mxu0 0.0
        %923 = vmatprep.subr.mxu0 0.0
        %924 = vmatpush1.xpose.msra.mxu0 0.0
        %925 = vmatprep.subr.mxu0 0.0
        %926 = vmatpush1.xpose.msra.mxu0 0.0
        %927 = vmatprep.subr.mxu0 0.0
        %928 = vmatpush1.xpose.msra.mxu0 0.0
        %929 = vmatprep.subr.mxu0 0.0
        %930 = vmatpush1.xpose.msra.mxu0 0.0
        %931 = vmatprep.subr.mxu0 0.0
        %932 = vmatpush1.xpose.msra.mxu0 0.0
        %933 = vmatprep.subr.mxu0 0.0
        %934 = vmatpush1.xpose.msra.mxu0 0.0
        %935 = vmatprep.subr.mxu0 0.0
        %936 = vmatpush1.xpose.msra.mxu0 0.0
        %937 = vmatprep.subr.mxu0 0.0
        %938 = vmatpush1.xpose.msra.mxu0 0.0
        %939 = vmatprep.subr.mxu0 0.0
        %940 = vmatpush1.xpose.msra.mxu0 0.0
        %941 = vmatprep.subr.mxu0 0.0
        %942 = vmatpush1.xpose.msra.mxu0 0.0
        %943 = vmatprep.subr.mxu0 0.0
        %944 = vmatpush1.xpose.msra.mxu0 0.0
        %945 = vmatprep.subr.mxu0 0.0
        %946 = vmatpush1.xpose.msra.mxu0 0.0
        %947 = vmatprep.subr.mxu0 0.0
        %948 = vmatpush1.xpose.msra.mxu0 0.0
        %949 = vmatprep.subr.mxu0 0.0
        %950 = vmatpush1.xpose.msra.mxu0 0.0
        %951 = vmatprep.subr.mxu0 0.0
        %952 = vmatpush1.xpose.msra.mxu0 0.0
        %953 = vmatprep.subr.mxu0 0.0
        %954 = vmatpush1.xpose.msra.mxu0 0.0
        %955 = vmatprep.subr.mxu0 0.0
        %956 = vmatpush1.xpose.msra.mxu0 0.0
        %957 = vmatprep.subr.mxu0 0.0
        %958 = vmatpush1.xpose.msra.mxu0 0.0
        %959 = vmatprep.subr.mxu0 0.0
        %960 = vmatpush1.xpose.msra.mxu0 0.0
        %961 = vmatprep.subr.mxu0 0.0
        %962 = vmatpush1.xpose.msra.mxu0 0.0
        %963 = vmatprep.subr.mxu0 0.0
        %964 = vmatpush1.xpose.msra.mxu0 0.0
        %965 = vmatprep.subr.mxu0 0.0
        %966 = vmatpush1.xpose.msra.mxu0 0.0
        %967 = vmatprep.subr.mxu0 0.0
        %968 = vmatpush1.xpose.msra.mxu0 0.0
        %969 = vmatprep.subr.mxu0 0.0
        %970 = vmatpush1.xpose.msra.mxu0 0.0
        %971 = vmatprep.subr.mxu0 0.0
        %972 = vmatpush1.xpose.msra.mxu0 0.0
        %973 = vmatprep.subr.mxu0 0.0
        %974 = vmatpush1.xpose.msra.mxu0 0.0
        %975 = vmatprep.subr.mxu0 0.0
        %976 = vmatpush1.xpose.msra.mxu0 0.0
        %977 = vmatprep.subr.mxu0 0.0
        %978 = vmatpush1.xpose.msra.mxu0 0.0
        %979 = vmatprep.mubr.f32.mxu0 0.0
        %980 = vmatmul.mubr.f32.gmra.mrb[0].mxu0 %v910
        %v981 = vpop.f32.mrb[0].mxu0
        %v982 = vadd.f32 0.0, %v981
        %v983 = vpop.f32.mrb[0].mxu0
        %984 = vdwg.mxu0
        %v986 = vsel %vm908, %v613, 0
        %v989 = vsel %vm908, %v759, 0
        %991 = vmatprep.subr.mxu0 0.0
        %992 = vmatpush1.xpose.msra.mxu0 %v989
        %993 = vmatprep.subr.mxu0 0.0
        %994 = vmatpush1.xpose.msra.mxu0 0.0
        %995 = vmatprep.subr.mxu0 0.0
        %996 = vmatpush1.xpose.msra.mxu0 0.0
        %997 = vmatprep.subr.mxu0 0.0
        %998 = vmatpush1.xpose.msra.mxu0 0.0
        %999 = vmatprep.subr.mxu0 0.0
        %1000 = vmatpush1.xpose.msra.mxu0 0.0
        %1001 = vmatprep.subr.mxu0 0.0
        %1002 = vmatpush1.xpose.msra.mxu0 0.0
        %1003 = vmatprep.subr.mxu0 0.0
        %1004 = vmatpush1.xpose.msra.mxu0 0.0
        %1005 = vmatprep.subr.mxu0 0.0
        %1006 = vmatpush1.xpose.msra.mxu0 0.0
        %1007 = vmatprep.subr.mxu0 0.0
        %1008 = vmatpush1.xpose.msra.mxu0 0.0
        %1009 = vmatprep.subr.mxu0 0.0
        %1010 = vmatpush1.xpose.msra.mxu0 0.0
        %1011 = vmatprep.subr.mxu0 0.0
        %1012 = vmatpush1.xpose.msra.mxu0 0.0
        %1013 = vmatprep.subr.mxu0 0.0
        %1014 = vmatpush1.xpose.msra.mxu0 0.0
        %1015 = vmatprep.subr.mxu0 0.0
        %1016 = vmatpush1.xpose.msra.mxu0 0.0
        %1017 = vmatprep.subr.mxu0 0.0
        %1018 = vmatpush1.xpose.msra.mxu0 0.0
        %1019 = vmatprep.subr.mxu0 0.0
        %1020 = vmatpush1.xpose.msra.mxu0 0.0
        %1021 = vmatprep.subr.mxu0 0.0
        %1022 = vmatpush1.xpose.msra.mxu0 0.0
        %1023 = vmatprep.subr.mxu0 0.0
        %1024 = vmatpush1.xpose.msra.mxu0 0.0
        %1025 = vmatprep.subr.mxu0 0.0
        %1026 = vmatpush1.xpose.msra.mxu0 0.0
        %1027 = vmatprep.subr.mxu0 0.0
        %1028 = vmatpush1.xpose.msra.mxu0 0.0
        %1029 = vmatprep.subr.mxu0 0.0
        %1030 = vmatpush1.xpose.msra.mxu0 0.0
        %1031 = vmatprep.subr.mxu0 0.0
        %1032 = vmatpush1.xpose.msra.mxu0 0.0
        %1033 = vmatprep.subr.mxu0 0.0
        %1034 = vmatpush1.xpose.msra.mxu0 0.0
        %1035 = vmatprep.subr.mxu0 0.0
        %1036 = vmatpush1.xpose.msra.mxu0 0.0
        %1037 = vmatprep.subr.mxu0 0.0
        %1038 = vmatpush1.xpose.msra.mxu0 0.0
        %1039 = vmatprep.subr.mxu0 0.0
        %1040 = vmatpush1.xpose.msra.mxu0 0.0
        %1041 = vmatprep.subr.mxu0 0.0
        %1042 = vmatpush1.xpose.msra.mxu0 0.0
        %1043 = vmatprep.subr.mxu0 0.0
        %1044 = vmatpush1.xpose.msra.mxu0 0.0
        %1045 = vmatprep.subr.mxu0 0.0
        %1046 = vmatpush1.xpose.msra.mxu0 0.0
        %1047 = vmatprep.subr.mxu0 0.0
        %1048 = vmatpush1.xpose.msra.mxu0 0.0
        %1049 = vmatprep.subr.mxu0 0.0
        %1050 = vmatpush1.xpose.msra.mxu0 0.0
        %1051 = vmatprep.subr.mxu0 0.0
        %1052 = vmatpush1.xpose.msra.mxu0 0.0
        %1053 = vmatprep.subr.mxu0 0.0
        %1054 = vmatpush1.xpose.msra.mxu0 0.0
        %1055 = vmatprep.mubr.f32.mxu0 0.0
        %1056 = vmatmul.mubr.f32.gmra.mrb[0].mxu0 %v986
        %v1057 = vpop.f32.mrb[0].mxu0
        %v1058 = vadd.f32 0.0, %v1057
        %v1059 = vpop.f32.mrb[0].mxu0
        %1060 = vdwg.mxu0
        %v1062 = vsel %vm908, %v614, 0
        %v1065 = vsel %vm908, %v760, 0
        %1067 = vmatprep.subr.mxu0 0.0
        %1068 = vmatpush1.xpose.msra.mxu0 %v1065
        %1069 = vmatprep.subr.mxu0 0.0
        %1070 = vmatpush1.xpose.msra.mxu0 0.0
        %1071 = vmatprep.subr.mxu0 0.0
        %1072 = vmatpush1.xpose.msra.mxu0 0.0
        %1073 = vmatprep.subr.mxu0 0.0
        %1074 = vmatpush1.xpose.msra.mxu0 0.0
        %1075 = vmatprep.subr.mxu0 0.0
        %1076 = vmatpush1.xpose.msra.mxu0 0.0
        %1077 = vmatprep.subr.mxu0 0.0
        %1078 = vmatpush1.xpose.msra.mxu0 0.0
        %1079 = vmatprep.subr.mxu0 0.0
        %1080 = vmatpush1.xpose.msra.mxu0 0.0
        %1081 = vmatprep.subr.mxu0 0.0
        %1082 = vmatpush1.xpose.msra.mxu0 0.0
        %1083 = vmatprep.subr.mxu0 0.0
        %1084 = vmatpush1.xpose.msra.mxu0 0.0
        %1085 = vmatprep.subr.mxu0 0.0
        %1086 = vmatpush1.xpose.msra.mxu0 0.0
        %1087 = vmatprep.subr.mxu0 0.0
        %1088 = vmatpush1.xpose.msra.mxu0 0.0
        %1089 = vmatprep.subr.mxu0 0.0
        %1090 = vmatpush1.xpose.msra.mxu0 0.0
        %1091 = vmatprep.subr.mxu0 0.0
        %1092 = vmatpush1.xpose.msra.mxu0 0.0
        %1093 = vmatprep.subr.mxu0 0.0
        %1094 = vmatpush1.xpose.msra.mxu0 0.0
        %1095 = vmatprep.subr.mxu0 0.0
        %1096 = vmatpush1.xpose.msra.mxu0 0.0
        %1097 = vmatprep.subr.mxu0 0.0
        %1098 = vmatpush1.xpose.msra.mxu0 0.0
        %1099 = vmatprep.subr.mxu0 0.0
        %1100 = vmatpush1.xpose.msra.mxu0 0.0
        %1101 = vmatprep.subr.mxu0 0.0
        %1102 = vmatpush1.xpose.msra.mxu0 0.0
        %1103 = vmatprep.subr.mxu0 0.0
        %1104 = vmatpush1.xpose.msra.mxu0 0.0
        %1105 = vmatprep.subr.mxu0 0.0
        %1106 = vmatpush1.xpose.msra.mxu0 0.0
        %1107 = vmatprep.subr.mxu0 0.0
        %1108 = vmatpush1.xpose.msra.mxu0 0.0
        %1109 = vmatprep.subr.mxu0 0.0
        %1110 = vmatpush1.xpose.msra.mxu0 0.0
        %1111 = vmatprep.subr.mxu0 0.0
        %1112 = vmatpush1.xpose.msra.mxu0 0.0
        %1113 = vmatprep.subr.mxu0 0.0
        %1114 = vmatpush1.xpose.msra.mxu0 0.0
        %1115 = vmatprep.subr.mxu0 0.0
        %1116 = vmatpush1.xpose.msra.mxu0 0.0
        %1117 = vmatprep.subr.mxu0 0.0
        %1118 = vmatpush1.xpose.msra.mxu0 0.0
        %1119 = vmatprep.subr.mxu0 0.0
        %1120 = vmatpush1.xpose.msra.mxu0 0.0
        %1121 = vmatprep.subr.mxu0 0.0
        %1122 = vmatpush1.xpose.msra.mxu0 0.0
        %1123 = vmatprep.subr.mxu0 0.0
        %1124 = vmatpush1.xpose.msra.mxu0 0.0
        %1125 = vmatprep.subr.mxu0 0.0
        %1126 = vmatpush1.xpose.msra.mxu0 0.0
        %1127 = vmatprep.subr.mxu0 0.0
        %1128 = vmatpush1.xpose.msra.mxu0 0.0
        %1129 = vmatprep.subr.mxu0 0.0
        %1130 = vmatpush1.xpose.msra.mxu0 0.0
        %1131 = vmatprep.mubr.f32.mxu0 0.0
        %1132 = vmatmul.mubr.f32.gmra.mrb[0].mxu0 %v1062
        %v1133 = vpop.f32.mrb[0].mxu0
        %v1134 = vadd.f32 0.0, %v1133
        %v1135 = vpop.f32.mrb[0].mxu0
        %1136 = vdwg.mxu0
        %v1138 = vsel %vm908, %v615, 0
        %v1141 = vsel %vm908, %v761, 0
        %1143 = vmatprep.subr.mxu0 0.0
        %1144 = vmatpush1.xpose.msra.mxu0 %v1141
        %1145 = vmatprep.subr.mxu0 0.0
        %1146 = vmatpush1.xpose.msra.mxu0 0.0
        %1147 = vmatprep.subr.mxu0 0.0
        %1148 = vmatpush1.xpose.msra.mxu0 0.0
        %1149 = vmatprep.subr.mxu0 0.0
        %1150 = vmatpush1.xpose.msra.mxu0 0.0
        %1151 = vmatprep.subr.mxu0 0.0
        %1152 = vmatpush1.xpose.msra.mxu0 0.0
        %1153 = vmatprep.subr.mxu0 0.0
        %1154 = vmatpush1.xpose.msra.mxu0 0.0
        %1155 = vmatprep.subr.mxu0 0.0
        %1156 = vmatpush1.xpose.msra.mxu0 0.0
        %1157 = vmatprep.subr.mxu0 0.0
        %1158 = vmatpush1.xpose.msra.mxu0 0.0
        %1159 = vmatprep.subr.mxu0 0.0
        %1160 = vmatpush1.xpose.msra.mxu0 0.0
        %1161 = vmatprep.subr.mxu0 0.0
        %1162 = vmatpush1.xpose.msra.mxu0 0.0
        %1163 = vmatprep.subr.mxu0 0.0
        %1164 = vmatpush1.xpose.msra.mxu0 0.0
        %1165 = vmatprep.subr.mxu0 0.0
        %1166 = vmatpush1.xpose.msra.mxu0 0.0
        %1167 = vmatprep.subr.mxu0 0.0
        %1168 = vmatpush1.xpose.msra.mxu0 0.0
        %1169 = vmatprep.subr.mxu0 0.0
        %1170 = vmatpush1.xpose.msra.mxu0 0.0
        %1171 = vmatprep.subr.mxu0 0.0
        %1172 = vmatpush1.xpose.msra.mxu0 0.0
        %1173 = vmatprep.subr.mxu0 0.0
        %1174 = vmatpush1.xpose.msra.mxu0 0.0
        %1175 = vmatprep.subr.mxu0 0.0
        %1176 = vmatpush1.xpose.msra.mxu0 0.0
        %1177 = vmatprep.subr.mxu0 0.0
        %1178 = vmatpush1.xpose.msra.mxu0 0.0
        %1179 = vmatprep.subr.mxu0 0.0
        %1180 = vmatpush1.xpose.msra.mxu0 0.0
        %1181 = vmatprep.subr.mxu0 0.0
        %1182 = vmatpush1.xpose.msra.mxu0 0.0
        %1183 = vmatprep.subr.mxu0 0.0
        %1184 = vmatpush1.xpose.msra.mxu0 0.0
        %1185 = vmatprep.subr.mxu0 0.0
        %1186 = vmatpush1.xpose.msra.mxu0 0.0
        %1187 = vmatprep.subr.mxu0 0.0
        %1188 = vmatpush1.xpose.msra.mxu0 0.0
        %1189 = vmatprep.subr.mxu0 0.0
        %1190 = vmatpush1.xpose.msra.mxu0 0.0
        %1191 = vmatprep.subr.mxu0 0.0
        %1192 = vmatpush1.xpose.msra.mxu0 0.0
        %1193 = vmatprep.subr.mxu0 0.0
        %1194 = vmatpush1.xpose.msra.mxu0 0.0
        %1195 = vmatprep.subr.mxu0 0.0
        %1196 = vmatpush1.xpose.msra.mxu0 0.0
        %1197 = vmatprep.subr.mxu0 0.0
        %1198 = vmatpush1.xpose.msra.mxu0 0.0
        %1199 = vmatprep.subr.mxu0 0.0
        %1200 = vmatpush1.xpose.msra.mxu0 0.0
        %1201 = vmatprep.subr.mxu0 0.0
        %1202 = vmatpush1.xpose.msra.mxu0 0.0
        %1203 = vmatprep.subr.mxu0 0.0
        %1204 = vmatpush1.xpose.msra.mxu0 0.0
        %1205 = vmatprep.subr.mxu0 0.0
        %1206 = vmatpush1.xpose.msra.mxu0 0.0
        %1207 = vmatprep.mubr.f32.mxu0 0.0
        %1208 = vmatmul.mubr.f32.gmra.mrb[0].mxu0 %v1138
        %v1209 = vpop.f32.mrb[0].mxu0
        %v1210 = vadd.f32 0.0, %v1209
        %v1211 = vpop.f32.mrb[0].mxu0
        %1212 = vdwg.mxu0
        %v1213 = vmul.f32 %v982, 0.35355338
        %v1214 = vmul.f32 %v1058, 0.35355338
        %v1215 = vmul.f32 %v1134, 0.35355338
        %v1216 = vmul.f32 %v1210, 0.35355338
        %v1217 = vsel %vm908, %v1213, -inf
        %1218 = vmax.xlane.f32.xlu0 %v1217
        %v1219 = vpop.xlane.xlu0 %1218
        %v1220 = vsel %vm908, %v1214, -inf
        %1221 = vmax.xlane.f32.xlu0 %v1220
        %v1222 = vpop.xlane.xlu0 %1221
        %v1223 = vsel %vm908, %v1215, -inf
        %1224 = vmax.xlane.f32.xlu0 %v1223
        %v1225 = vpop.xlane.xlu0 %1224
        %v1226 = vsel %vm908, %v1216, -inf
        %1227 = vmax.xlane.f32.xlu0 %v1226
        %v1228 = vpop.xlane.xlu0 %1227
        %v1229 = vsub.f32 %v1213, %v1219
        %v1230 = vsub.f32 %v1214, %v1222
        %v1231 = vsub.f32 %v1215, %v1225
        %v1232 = vsub.f32 %v1216, %v1228
        %v1233 = vmul.f32 %v1229, 1.442695
        %v1234 = vpow.pop %v1233
        %v1235 = vmul.f32 %v1230, 1.442695
        %v1236 = vpow.pop %v1235
        %v1237 = vmul.f32 %v1231, 1.442695
        %v1238 = vpow.pop %v1237
        %v1239 = vmul.f32 %v1232, 1.442695
        %v1240 = vpow.pop %v1239
        %v1241 = vsel %vm908, %v1234, 0.0
        %1242 = vadd.xlane.f32.xlu0 %v1241
        %v1243 = vpop.xlane.xlu0 %1242
        %v1244 = vsel %vm908, %v1236, 0.0
        %1245 = vadd.xlane.f32.xlu0 %v1244
        %v1246 = vpop.xlane.xlu0 %1245
        %v1247 = vsel %vm908, %v1238, 0.0
        %1248 = vadd.xlane.f32.xlu0 %v1247
        %v1249 = vpop.xlane.xlu0 %1248
        %v1250 = vsel %vm908, %v1240, 0.0
        %1251 = vadd.xlane.f32.xlu0 %v1250
        %v1252 = vpop.xlane.xlu0 %1251
        %v1253 = vrcp.pop %v1243
        %v1254 = vmul.f32 %v1234, %v1253
        %v1255 = vrcp.pop %v1246
        %v1256 = vmul.f32 %v1236, %v1255
        %v1257 = vrcp.pop %v1249
        %v1258 = vmul.f32 %v1238, %v1257
        %v1259 = vrcp.pop %v1252
        %v1260 = vmul.f32 %v1240, %v1259
        %v1262 = vsel %vm908, %v1254, 0
        %1264 = vmatprep.subr.mxu0 0.0
        %1265 = vmatpush1.msra.mxu0 %v904
        %1266 = vmatprep.subr.mxu0 0.0
        %1267 = vmatpush1.msra.mxu0 0.0
        %1268 = vmatprep.subr.mxu0 0.0
        %1269 = vmatpush1.msra.mxu0 0.0
        %1270 = vmatprep.subr.mxu0 0.0
        %1271 = vmatpush1.msra.mxu0 0.0
        %1272 = vmatprep.subr.mxu0 0.0
        %1273 = vmatpush1.msra.mxu0 0.0
        %1274 = vmatprep.subr.mxu0 0.0
        %1275 = vmatpush1.msra.mxu0 0.0
        %1276 = vmatprep.subr.mxu0 0.0
        %1277 = vmatpush1.msra.mxu0 0.0
        %1278 = vmatprep.subr.mxu0 0.0
        %1279 = vmatpush1.msra.mxu0 0.0
        %1280 = vmatprep.subr.mxu0 0.0
        %1281 = vmatpush1.msra.mxu0 0.0
        %1282 = vmatprep.subr.mxu0 0.0
        %1283 = vmatpush1.msra.mxu0 0.0
        %1284 = vmatprep.subr.mxu0 0.0
        %1285 = vmatpush1.msra.mxu0 0.0
        %1286 = vmatprep.subr.mxu0 0.0
        %1287 = vmatpush1.msra.mxu0 0.0
        %1288 = vmatprep.subr.mxu0 0.0
        %1289 = vmatpush1.msra.mxu0 0.0
        %1290 = vmatprep.subr.mxu0 0.0
        %1291 = vmatpush1.msra.mxu0 0.0
        %1292 = vmatprep.subr.mxu0 0.0
        %1293 = vmatpush1.msra.mxu0 0.0
        %1294 = vmatprep.subr.mxu0 0.0
        %1295 = vmatpush1.msra.mxu0 0.0
        %1296 = vmatprep.subr.mxu0 0.0
        %1297 = vmatpush1.msra.mxu0 0.0
        %1298 = vmatprep.subr.mxu0 0.0
        %1299 = vmatpush1.msra.mxu0 0.0
        %1300 = vmatprep.subr.mxu0 0.0
        %1301 = vmatpush1.msra.mxu0 0.0
        %1302 = vmatprep.subr.mxu0 0.0
        %1303 = vmatpush1.msra.mxu0 0.0
        %1304 = vmatprep.subr.mxu0 0.0
        %1305 = vmatpush1.msra.mxu0 0.0
        %1306 = vmatprep.subr.mxu0 0.0
        %1307 = vmatpush1.msra.mxu0 0.0
        %1308 = vmatprep.subr.mxu0 0.0
        %1309 = vmatpush1.msra.mxu0 0.0
        %1310 = vmatprep.subr.mxu0 0.0
        %1311 = vmatpush1.msra.mxu0 0.0
        %1312 = vmatprep.subr.mxu0 0.0
        %1313 = vmatpush1.msra.mxu0 0.0
        %1314 = vmatprep.subr.mxu0 0.0
        %1315 = vmatpush1.msra.mxu0 0.0
        %1316 = vmatprep.subr.mxu0 0.0
        %1317 = vmatpush1.msra.mxu0 0.0
        %1318 = vmatprep.subr.mxu0 0.0
        %1319 = vmatpush1.msra.mxu0 0.0
        %1320 = vmatprep.subr.mxu0 0.0
        %1321 = vmatpush1.msra.mxu0 0.0
        %1322 = vmatprep.subr.mxu0 0.0
        %1323 = vmatpush1.msra.mxu0 0.0
        %1324 = vmatprep.subr.mxu0 0.0
        %1325 = vmatpush1.msra.mxu0 0.0
        %1326 = vmatprep.subr.mxu0 0.0
        %1327 = vmatpush1.msra.mxu0 0.0
        %1328 = vmatprep.mubr.f32.mxu0 0.0
        %1329 = vmatmul.mubr.f32.gmra.mrb[0].mxu0 %v1262
        %v1330 = vpop.f32.mrb[0].mxu0
        %v1331 = vadd.f32 0.0, %v1330
        %v1332 = vpop.f32.mrb[0].mxu0
        %1333 = vdwg.mxu0
        %v1335 = vsel %vm908, %v1256, 0
        %1337 = vmatprep.subr.mxu0 0.0
        %1338 = vmatpush1.msra.mxu0 %v905
        %1339 = vmatprep.subr.mxu0 0.0
        %1340 = vmatpush1.msra.mxu0 0.0
        %1341 = vmatprep.subr.mxu0 0.0
        %1342 = vmatpush1.msra.mxu0 0.0
        %1343 = vmatprep.subr.mxu0 0.0
        %1344 = vmatpush1.msra.mxu0 0.0
        %1345 = vmatprep.subr.mxu0 0.0
        %1346 = vmatpush1.msra.mxu0 0.0
        %1347 = vmatprep.subr.mxu0 0.0
        %1348 = vmatpush1.msra.mxu0 0.0
        %1349 = vmatprep.subr.mxu0 0.0
        %1350 = vmatpush1.msra.mxu0 0.0
        %1351 = vmatprep.subr.mxu0 0.0
        %1352 = vmatpush1.msra.mxu0 0.0
        %1353 = vmatprep.subr.mxu0 0.0
        %1354 = vmatpush1.msra.mxu0 0.0
        %1355 = vmatprep.subr.mxu0 0.0
        %1356 = vmatpush1.msra.mxu0 0.0
        %1357 = vmatprep.subr.mxu0 0.0
        %1358 = vmatpush1.msra.mxu0 0.0
        %1359 = vmatprep.subr.mxu0 0.0
        %1360 = vmatpush1.msra.mxu0 0.0
        %1361 = vmatprep.subr.mxu0 0.0
        %1362 = vmatpush1.msra.mxu0 0.0
        %1363 = vmatprep.subr.mxu0 0.0
        %1364 = vmatpush1.msra.mxu0 0.0
        %1365 = vmatprep.subr.mxu0 0.0
        %1366 = vmatpush1.msra.mxu0 0.0
        %1367 = vmatprep.subr.mxu0 0.0
        %1368 = vmatpush1.msra.mxu0 0.0
        %1369 = vmatprep.subr.mxu0 0.0
        %1370 = vmatpush1.msra.mxu0 0.0
        %1371 = vmatprep.subr.mxu0 0.0
        %1372 = vmatpush1.msra.mxu0 0.0
        %1373 = vmatprep.subr.mxu0 0.0
        %1374 = vmatpush1.msra.mxu0 0.0
        %1375 = vmatprep.subr.mxu0 0.0
        %1376 = vmatpush1.msra.mxu0 0.0
        %1377 = vmatprep.subr.mxu0 0.0
        %1378 = vmatpush1.msra.mxu0 0.0
        %1379 = vmatprep.subr.mxu0 0.0
        %1380 = vmatpush1.msra.mxu0 0.0
        %1381 = vmatprep.subr.mxu0 0.0
        %1382 = vmatpush1.msra.mxu0 0.0
        %1383 = vmatprep.subr.mxu0 0.0
        %1384 = vmatpush1.msra.mxu0 0.0
        %1385 = vmatprep.subr.mxu0 0.0
        %1386 = vmatpush1.msra.mxu0 0.0
        %1387 = vmatprep.subr.mxu0 0.0
        %1388 = vmatpush1.msra.mxu0 0.0
        %1389 = vmatprep.subr.mxu0 0.0
        %1390 = vmatpush1.msra.mxu0 0.0
        %1391 = vmatprep.subr.mxu0 0.0
        %1392 = vmatpush1.msra.mxu0 0.0
        %1393 = vmatprep.subr.mxu0 0.0
        %1394 = vmatpush1.msra.mxu0 0.0
        %1395 = vmatprep.subr.mxu0 0.0
        %1396 = vmatpush1.msra.mxu0 0.0
        %1397 = vmatprep.subr.mxu0 0.0
        %1398 = vmatpush1.msra.mxu0 0.0
        %1399 = vmatprep.subr.mxu0 0.0
        %1400 = vmatpush1.msra.mxu0 0.0
        %1401 = vmatprep.mubr.f32.mxu0 0.0
        %1402 = vmatmul.mubr.f32.gmra.mrb[0].mxu0 %v1335
        %v1403 = vpop.f32.mrb[0].mxu0
        %v1404 = vadd.f32 0.0, %v1403
        %v1405 = vpop.f32.mrb[0].mxu0
        %1406 = vdwg.mxu0
        %v1408 = vsel %vm908, %v1258, 0
        %1410 = vmatprep.subr.mxu0 0.0
        %1411 = vmatpush1.msra.mxu0 %v906
        %1412 = vmatprep.subr.mxu0 0.0
        %1413 = vmatpush1.msra.mxu0 0.0
        %1414 = vmatprep.subr.mxu0 0.0
        %1415 = vmatpush1.msra.mxu0 0.0
        %1416 = vmatprep.subr.mxu0 0.0
        %1417 = vmatpush1.msra.mxu0 0.0
        %1418 = vmatprep.subr.mxu0 0.0
        %1419 = vmatpush1.msra.mxu0 0.0
        %1420 = vmatprep.subr.mxu0 0.0
        %1421 = vmatpush1.msra.mxu0 0.0
        %1422 = vmatprep.subr.mxu0 0.0
        %1423 = vmatpush1.msra.mxu0 0.0
        %1424 = vmatprep.subr.mxu0 0.0
        %1425 = vmatpush1.msra.mxu0 0.0
        %1426 = vmatprep.subr.mxu0 0.0
        %1427 = vmatpush1.msra.mxu0 0.0
        %1428 = vmatprep.subr.mxu0 0.0
        %1429 = vmatpush1.msra.mxu0 0.0
        %1430 = vmatprep.subr.mxu0 0.0
        %1431 = vmatpush1.msra.mxu0 0.0
        %1432 = vmatprep.subr.mxu0 0.0
        %1433 = vmatpush1.msra.mxu0 0.0
        %1434 = vmatprep.subr.mxu0 0.0
        %1435 = vmatpush1.msra.mxu0 0.0
        %1436 = vmatprep.subr.mxu0 0.0
        %1437 = vmatpush1.msra.mxu0 0.0
        %1438 = vmatprep.subr.mxu0 0.0
        %1439 = vmatpush1.msra.mxu0 0.0
        %1440 = vmatprep.subr.mxu0 0.0
        %1441 = vmatpush1.msra.mxu0 0.0
        %1442 = vmatprep.subr.mxu0 0.0
        %1443 = vmatpush1.msra.mxu0 0.0
        %1444 = vmatprep.subr.mxu0 0.0
        %1445 = vmatpush1.msra.mxu0 0.0
        %1446 = vmatprep.subr.mxu0 0.0
        %1447 = vmatpush1.msra.mxu0 0.0
        %1448 = vmatprep.subr.mxu0 0.0
        %1449 = vmatpush1.msra.mxu0 0.0
        %1450 = vmatprep.subr.mxu0 0.0
        %1451 = vmatpush1.msra.mxu0 0.0
        %1452 = vmatprep.subr.mxu0 0.0
        %1453 = vmatpush1.msra.mxu0 0.0
        %1454 = vmatprep.subr.mxu0 0.0
        %1455 = vmatpush1.msra.mxu0 0.0
        %1456 = vmatprep.subr.mxu0 0.0
        %1457 = vmatpush1.msra.mxu0 0.0
        %1458 = vmatprep.subr.mxu0 0.0
        %1459 = vmatpush1.msra.mxu0 0.0
        %1460 = vmatprep.subr.mxu0 0.0
        %1461 = vmatpush1.msra.mxu0 0.0
        %1462 = vmatprep.subr.mxu0 0.0
        %1463 = vmatpush1.msra.mxu0 0.0
        %1464 = vmatprep.subr.mxu0 0.0
        %1465 = vmatpush1.msra.mxu0 0.0
        %1466 = vmatprep.subr.mxu0 0.0
        %1467 = vmatpush1.msra.mxu0 0.0
        %1468 = vmatprep.subr.mxu0 0.0
        %1469 = vmatpush1.msra.mxu0 0.0
        %1470 = vmatprep.subr.mxu0 0.0
        %1471 = vmatpush1.msra.mxu0 0.0
        %1472 = vmatprep.subr.mxu0 0.0
        %1473 = vmatpush1.msra.mxu0 0.0
        %1474 = vmatprep.mubr.f32.mxu0 0.0
        %1475 = vmatmul.mubr.f32.gmra.mrb[0].mxu0 %v1408
        %v1476 = vpop.f32.mrb[0].mxu0
        %v1477 = vadd.f32 0.0, %v1476
        %v1478 = vpop.f32.mrb[0].mxu0
        %1479 = vdwg.mxu0
        %v1481 = vsel %vm908, %v1260, 0
        %1483 = vmatprep.subr.mxu0 0.0
        %1484 = vmatpush1.msra.mxu0 %v907
        %1485 = vmatprep.subr.mxu0 0.0
        %1486 = vmatpush1.msra.mxu0 0.0
        %1487 = vmatprep.subr.mxu0 0.0
        %1488 = vmatpush1.msra.mxu0 0.0
        %1489 = vmatprep.subr.mxu0 0.0
        %1490 = vmatpush1.msra.mxu0 0.0
        %1491 = vmatprep.subr.mxu0 0.0
        %1492 = vmatpush1.msra.mxu0 0.0
        %1493 = vmatprep.subr.mxu0 0.0
        %1494 = vmatpush1.msra.mxu0 0.0
        %1495 = vmatprep.subr.mxu0 0.0
        %1496 = vmatpush1.msra.mxu0 0.0
        %1497 = vmatprep.subr.mxu0 0.0
        %1498 = vmatpush1.msra.mxu0 0.0
        %1499 = vmatprep.subr.mxu0 0.0
        %1500 = vmatpush1.msra.mxu0 0.0
        %1501 = vmatprep.subr.mxu0 0.0
        %1502 = vmatpush1.msra.mxu0 0.0
        %1503 = vmatprep.subr.mxu0 0.0
        %1504 = vmatpush1.msra.mxu0 0.0
        %1505 = vmatprep.subr.mxu0 0.0
        %1506 = vmatpush1.msra.mxu0 0.0
        %1507 = vmatprep.subr.mxu0 0.0
        %1508 = vmatpush1.msra.mxu0 0.0
        %1509 = vmatprep.subr.mxu0 0.0
        %1510 = vmatpush1.msra.mxu0 0.0
        %1511 = vmatprep.subr.mxu0 0.0
        %1512 = vmatpush1.msra.mxu0 0.0
        %1513 = vmatprep.subr.mxu0 0.0
        %1514 = vmatpush1.msra.mxu0 0.0
        %1515 = vmatprep.subr.mxu0 0.0
        %1516 = vmatpush1.msra.mxu0 0.0
        %1517 = vmatprep.subr.mxu0 0.0
        %1518 = vmatpush1.msra.mxu0 0.0
        %1519 = vmatprep.subr.mxu0 0.0
        %1520 = vmatpush1.msra.mxu0 0.0
        %1521 = vmatprep.subr.mxu0 0.0
        %1522 = vmatpush1.msra.mxu0 0.0
        %1523 = vmatprep.subr.mxu0 0.0
        %1524 = vmatpush1.msra.mxu0 0.0
        %1525 = vmatprep.subr.mxu0 0.0
        %1526 = vmatpush1.msra.mxu0 0.0
        %1527 = vmatprep.subr.mxu0 0.0
        %1528 = vmatpush1.msra.mxu0 0.0
        %1529 = vmatprep.subr.mxu0 0.0
        %1530 = vmatpush1.msra.mxu0 0.0
        %1531 = vmatprep.subr.mxu0 0.0
        %1532 = vmatpush1.msra.mxu0 0.0
        %1533 = vmatprep.subr.mxu0 0.0
        %1534 = vmatpush1.msra.mxu0 0.0
        %1535 = vmatprep.subr.mxu0 0.0
        %1536 = vmatpush1.msra.mxu0 0.0
        %1537 = vmatprep.subr.mxu0 0.0
        %1538 = vmatpush1.msra.mxu0 0.0
        %1539 = vmatprep.subr.mxu0 0.0
        %1540 = vmatpush1.msra.mxu0 0.0
        %1541 = vmatprep.subr.mxu0 0.0
        %1542 = vmatpush1.msra.mxu0 0.0
        %1543 = vmatprep.subr.mxu0 0.0
        %1544 = vmatpush1.msra.mxu0 0.0
        %1545 = vmatprep.subr.mxu0 0.0
        %1546 = vmatpush1.msra.mxu0 0.0
        %1547 = vmatprep.mubr.f32.mxu0 0.0
        %1548 = vmatmul.mubr.f32.gmra.mrb[0].mxu0 %v1481
        %v1549 = vpop.f32.mrb[0].mxu0
        %v1550 = vadd.f32 0.0, %v1549
        %v1551 = vpop.f32.mrb[0].mxu0
        %1552 = vdwg.mxu0
        %v1553 = vcombine.low %v1331, %v1477
        %v1554 = vcombine.high %v1331, %v1477
        %v1556 = vunpack.c.l.s4 1983009808
        %v1557 = vunpack.c.0.s8 %v1556
        %v1558 = vlaneseq
        %v1559 = vshrl.u32 %v1558, 7
        %v1560 = vsub.s32 %v1557, %v1559
        %v1561 = vrot.slane %v1553, %v1560
        %v1563 = vunpack.c.l.s4 1983009808
        %v1564 = vunpack.c.0.s8 %v1563
        %v1565 = vlaneseq
        %v1566 = vshrl.u32 %v1565, 7
        %v1567 = vsub.s32 %v1564, %v1566
        %v1568 = vrot.slane %v1554, %v1567
        %v1569 = vcombine.low %v1404, %v1550
        %v1570 = vcombine.high %v1404, %v1550
        %v1572 = vunpack.c.l.s4 1983009808
        %v1573 = vunpack.c.0.s8 %v1572
        %v1574 = vlaneseq
        %v1575 = vshrl.u32 %v1574, 7
        %v1576 = vsub.s32 %v1573, %v1575
        %v1577 = vrot.slane %v1569, %v1576
        %v1579 = vunpack.c.l.s4 1983009808
        %v1580 = vunpack.c.0.s8 %v1579
        %v1581 = vlaneseq
        %v1582 = vshrl.u32 %v1581, 7
        %v1583 = vsub.s32 %v1580, %v1582
        %v1584 = vrot.slane %v1570, %v1583
        %v1585 = vcombine.low %v1561, %v1577
        %v1586 = vcombine.high %v1561, %v1577
        %v1588 = vunpack.c.l.s4 1934713408
        %v1589 = vunpack.c.0.s8 %v1588
        %v1590 = vlaneseq
        %v1591 = vshrl.u32 %v1590, 7
        %v1592 = vsub.s32 %v1589, %v1591
        %v1593 = vrot.slane %v1585, %v1592
        %v1595 = vunpack.c.l.s4 1934713408
        %v1596 = vunpack.c.0.s8 %v1595
        %v1597 = vlaneseq
        %v1598 = vshrl.u32 %v1597, 7
        %v1599 = vsub.s32 %v1596, %v1598
        %v1600 = vrot.slane %v1586, %v1599
        %v1601 = vcombine.low %v1568, %v1584
        %v1602 = vcombine.high %v1568, %v1584
        %v1604 = vunpack.c.l.s4 1934713408
        %v1605 = vunpack.c.0.s8 %v1604
        %v1606 = vlaneseq
        %v1607 = vshrl.u32 %v1606, 7
        %v1608 = vsub.s32 %v1605, %v1607
        %v1609 = vrot.slane %v1601, %v1608
        %v1611 = vunpack.c.l.s4 1934713408
        %v1612 = vunpack.c.0.s8 %v1611
        %v1613 = vlaneseq
        %v1614 = vshrl.u32 %v1613, 7
        %v1615 = vsub.s32 %v1612, %v1614
        %v1616 = vrot.slane %v1602, %v1615
        %v1617 = vcombine.high %v1593, 0.0
        %v1618 = vcombine.high %v1600, 0.0
        %v1619 = vcombine.high %v1609, 0.0
        %v1620 = vcombine.high %v1616, 0.0
        %v1621 = vcombine.low %v1593, %v1600
        %v1623 = vunpack.c.l.s4 1983009808
        %v1624 = vunpack.c.0.s8 %v1623
        %v1625 = vlaneseq
        %v1626 = vshrl.u32 %v1625, 7
        %v1627 = vsub.s32 %v1624, %v1626
        %v1628 = vrot.slane %v1621, %v1627
        %v1629 = vcombine.low %v1617, %v1618
        %v1631 = vunpack.c.l.s4 1983009808
        %v1632 = vunpack.c.0.s8 %v1631
        %v1633 = vlaneseq
        %v1634 = vshrl.u32 %v1633, 7
        %v1635 = vsub.s32 %v1632, %v1634
        %v1636 = vrot.slane %v1629, %v1635
        %v1637 = vcombine.low %v1609, %v1616
        %v1639 = vunpack.c.l.s4 1983009808
        %v1640 = vunpack.c.0.s8 %v1639
        %v1641 = vlaneseq
        %v1642 = vshrl.u32 %v1641, 7
        %v1643 = vsub.s32 %v1640, %v1642
        %v1644 = vrot.slane %v1637, %v1643
        %v1645 = vcombine.low %v1619, %v1620
        %v1647 = vunpack.c.l.s4 1983009808
        %v1648 = vunpack.c.0.s8 %v1647
        %v1649 = vlaneseq
        %v1650 = vshrl.u32 %v1649, 7
        %v1651 = vsub.s32 %v1648, %v1650
        %v1652 = vrot.slane %v1645, %v1651
        %v1653 = vcombine.low %v1628, %v1636
        %v1654 = vcombine.high %v1628, %v1636
        %v1656 = vunpack.c.l.s4 1934713408
        %v1657 = vunpack.c.0.s8 %v1656
        %v1658 = vlaneseq
        %v1659 = vshrl.u32 %v1658, 7
        %v1660 = vsub.s32 %v1657, %v1659
        %v1661 = vrot.slane %v1653, %v1660
        %v1663 = vunpack.c.l.s4 1934713408
        %v1664 = vunpack.c.0.s8 %v1663
        %v1665 = vlaneseq
        %v1666 = vshrl.u32 %v1665, 7
        %v1667 = vsub.s32 %v1664, %v1666
        %v1668 = vrot.slane %v1654, %v1667
        %v1669 = vcombine.low %v1644, %v1652
        %v1670 = vcombine.high %v1644, %v1652
        %v1672 = vunpack.c.l.s4 1934713408
        %v1673 = vunpack.c.0.s8 %v1672
        %v1674 = vlaneseq
        %v1675 = vshrl.u32 %v1674, 7
        %v1676 = vsub.s32 %v1673, %v1675
        %v1677 = vrot.slane %v1669, %v1676
        %v1679 = vunpack.c.l.s4 1934713408
        %v1680 = vunpack.c.0.s8 %v1679
        %v1681 = vlaneseq
        %v1682 = vshrl.u32 %v1681, 7
        %v1683 = vsub.s32 %v1680, %v1682
        %v1684 = vrot.slane %v1670, %v1683
        %v1685 = vcombine.low %v1661, %v1677
        %v1686 = vcombine.high %v1661, %v1677
        %v1687 = vcombine.low %v1668, %v1684
        %v1688 = vcombine.high %v1668, %v1684
        %1690 = vrot.lane.b32.xlu0 %v1686, 8
        %v1691 = vpop.permute.xlu0 %1690
        %1694 = vrot.lane.b32.xlu0 %v1687, 16
        %v1695 = vpop.permute.xlu0 %1694
        %1698 = vrot.lane.b32.xlu0 %v1688, 24
        %v1699 = vpop.permute.xlu0 %1698
        %v1701 = vsel %vm908, %v1685, %v1691
        %vm1702 = vcmask 130048
        %v1703 = vsel %vm1702, %v1701, %v1695
        %vm1704 = vcmask 195584
        %v1705 = vsel %vm1704, %v1703, %v1699
        %v1706 = vpack.c.bf16 %v1705, %v1705
        %s1707 = scalar_lea.vmem %s1, 48
        %v1708 = vld [vmem:[%s1707] sm:$0xf]
        %v1709 = vld [vmem:[%s1707 + $0x4] sm:$0xf]
        %v1710 = vld [vmem:[%s1707 + $0x8] sm:$0xf]
        %v1711 = vld [vmem:[%s1707 + $0xc] sm:$0xf]
        %v1712 = vlaneseq
        %v1713 = vshrl.u32 %v1712, 7
        %v1714 = vsub.s32 0, %v1713
        %v1715 = vrot.slane %v268, %v1714
        %v1720 = vunpack.c.l.b16 %v1708
        %v1721 = vunpack.c.l.b16 %v1709
        %v1722 = vunpack.c.l.b16 %v1710
        %v1723 = vunpack.c.l.b16 %v1711
        %v1724 = vpack.c.b16 %v1721, %v1720
        %v1725 = vpack.c.b16 %v1723, %v1722
        %v1729 = vsel %vm271, %v1706, 0
        %1731 = vmatprep.subr.bf16.mxu0 0
        %1732 = vmatpush1.bf16.msra.mxu0 %v1724
        %1733 = vmatprep.subr.bf16.mxu0 0
        %1734 = vmatpush1.bf16.msra.mxu0 %v1725
        %1735 = vmatprep.subr.bf16.mxu0 0
        %1736 = vmatpush1.bf16.msra.mxu0 0
        %1737 = vmatprep.subr.bf16.mxu0 0
        %1738 = vmatpush1.bf16.msra.mxu0 0
        %1739 = vmatprep.subr.bf16.mxu0 0
        %1740 = vmatpush1.bf16.msra.mxu0 0
        %1741 = vmatprep.subr.bf16.mxu0 0
        %1742 = vmatpush1.bf16.msra.mxu0 0
        %1743 = vmatprep.subr.bf16.mxu0 0
        %1744 = vmatpush1.bf16.msra.mxu0 0
        %1745 = vmatprep.subr.bf16.mxu0 0
        %1746 = vmatpush1.bf16.msra.mxu0 0
        %1747 = vmatprep.subr.bf16.mxu0 0
        %1748 = vmatpush1.bf16.msra.mxu0 0
        %1749 = vmatprep.subr.bf16.mxu0 0
        %1750 = vmatpush1.bf16.msra.mxu0 0
        %1751 = vmatprep.subr.bf16.mxu0 0
        %1752 = vmatpush1.bf16.msra.mxu0 0
        %1753 = vmatprep.subr.bf16.mxu0 0
        %1754 = vmatpush1.bf16.msra.mxu0 0
        %1755 = vmatprep.subr.bf16.mxu0 0
        %1756 = vmatpush1.bf16.msra.mxu0 0
        %1757 = vmatprep.subr.bf16.mxu0 0
        %1758 = vmatpush1.bf16.msra.mxu0 0
        %1759 = vmatprep.subr.bf16.mxu0 0
        %1760 = vmatpush1.bf16.msra.mxu0 0
        %1761 = vmatprep.subr.bf16.mxu0 0
        %1762 = vmatpush1.bf16.msra.mxu0 0
        %1763 = vmatprep.mubr.bf16.mxu0 0
        %1764 = vmatmul.mubr.bf16.gmra.mrb[0].mxu0 %v1729
        %v1765 = vpop.f32.mrb[0].mxu0
        %v1766 = vadd.f32 %v1715, %v1765
        %v1767 = vpop.f32.mrb[0].mxu0
        %v1768 = vpop.f32.mrb[0].mxu0
        %v1769 = vpop.f32.mrb[0].mxu0
        %1770 = vdwg.mxu0
        %v1771 = vadd.f32 %v263, %v1766
        %v1772 = vsel %vm271, %v1771, 0.0
        %1773 = vadd.xlane.f32.xlu0 %v1772
        %v1774 = vpop.xlane.xlu0 %1773
        %v1775 = vmul.f32 %v1774, %v275
        %v1776 = vsub.f32 %v1771, %v1775
        %v1777 = vmul.f32 %v1776, %v1776
        %v1778 = vsel %vm271, %v1777, 0.0
        %1779 = vadd.xlane.f32.xlu0 %v1778
        %v1780 = vpop.xlane.xlu0 %1779
        %v1781 = vmul.f32 %v1780, %v275
        %v1782 = vadd.f32 %v1781, 1e-05
        %v1783 = vrsqrt.pop %v1782
        %v1784 = vmul.f32 %v1776, %v1783
        %v1785 = vlaneseq
        %v1786 = vshrl.u32 %v1785, 7
        %v1787 = vsub.s32 0, %v1786
        %v1788 = vrot.slane %v266, %v1787
        %v1789 = vmul.f32 %v1784, %v1788
        %v1790 = vlaneseq
        %v1791 = vshrl.u32 %v1790, 7
        %v1792 = vsub.s32 0, %v1791
        %v1793 = vrot.slane %v267, %v1792
        %v1794 = vadd.f32 %v1789, %v1793
        %v1795 = vpack.c.bf16 %v1794, %v1794
        %v1796 = vld [vmem:[#allocation2] sm:$0xf]
        %v1797 = vld [vmem:[#allocation2 + $0x4] sm:$0xf]
        %v1798 = vld [vmem:[#allocation2 + $0x8] sm:$0xf]
        %v1799 = vld [vmem:[#allocation2 + $0xc] sm:$0xf]
        %v1801 = vlaneseq
        %v1802 = vshrl.u32 %v1801, 7
        %v1803 = vsub.s32 0, %v1802
        %v1804 = vrot.slane %v270, %v1803
        %v1810 = vunpack.c.l.b16 %v1796
        %v1811 = vunpack.c.l.b16 %v1797
        %v1812 = vunpack.c.l.b16 %v1798
        %v1813 = vunpack.c.l.b16 %v1799
        %v1814 = vpack.c.b16 %v1811, %v1810
        %v1815 = vpack.c.b16 %v1813, %v1812
        %v1819 = vsel %vm271, %v1795, 0
        %1821 = vmatprep.subr.bf16.mxu0 0
        %1822 = vmatpush1.bf16.msra.mxu0 %v1814
        %1823 = vmatprep.subr.bf16.mxu0 0
        %1824 = vmatpush1.bf16.msra.mxu0 %v1815
        %1825 = vmatprep.subr.bf16.mxu0 0
        %1826 = vmatpush1.bf16.msra.mxu0 0
        %1827 = vmatprep.subr.bf16.mxu0 0
        %1828 = vmatpush1.bf16.msra.mxu0 0
        %1829 = vmatprep.subr.bf16.mxu0 0
        %1830 = vmatpush1.bf16.msra.mxu0 0
        %1831 = vmatprep.subr.bf16.mxu0 0
        %1832 = vmatpush1.bf16.msra.mxu0 0
        %1833 = vmatprep.subr.bf16.mxu0 0
        %1834 = vmatpush1.bf16.msra.mxu0 0
        %1835 = vmatprep.subr.bf16.mxu0 0
        %1836 = vmatpush1.bf16.msra.mxu0 0
        %1837 = vmatprep.subr.bf16.mxu0 0
        %1838 = vmatpush1.bf16.msra.mxu0 0
        %1839 = vmatprep.subr.bf16.mxu0 0
        %1840 = vmatpush1.bf16.msra.mxu0 0
        %1841 = vmatprep.subr.bf16.mxu0 0
        %1842 = vmatpush1.bf16.msra.mxu0 0
        %1843 = vmatprep.subr.bf16.mxu0 0
        %1844 = vmatpush1.bf16.msra.mxu0 0
        %1845 = vmatprep.subr.bf16.mxu0 0
        %1846 = vmatpush1.bf16.msra.mxu0 0
        %1847 = vmatprep.subr.bf16.mxu0 0
        %1848 = vmatpush1.bf16.msra.mxu0 0
        %1849 = vmatprep.subr.bf16.mxu0 0
        %1850 = vmatpush1.bf16.msra.mxu0 0
        %1851 = vmatprep.subr.bf16.mxu0 0
        %1852 = vmatpush1.bf16.msra.mxu0 0
        %1853 = vmatprep.mubr.bf16.mxu0 0
        %1854 = vmatmul.mubr.bf16.gmra.mrb[0].mxu0 %v1819
        %v1855 = vpop.f32.mrb[0].mxu0
        %v1856 = vadd.f32 %v1804, %v1855
        %v1857 = vpop.f32.mrb[0].mxu0
        %v1858 = vpop.f32.mrb[0].mxu0
        %v1859 = vpop.f32.mrb[0].mxu0
        %1860 = vdwg.mxu0
        %v1861 = vmul.f32 %v1856, 0.5
        %v1862 = vmul.f32 %v1856, 0.70710677
        %v1863 = verf.f32.pop %v1862
        %v1864 = vadd.f32 %v1863, 1.0
        %v1865 = vmul.f32 %v1861, %v1864
        %v1866 = vpack.c.bf16 %v1865, %v1865
        %v1867 = vld [vmem:[%s3] sm:$0xf]
        %v1868 = vld [vmem:[%s3 + $0x4] sm:$0xf]
        %v1869 = vld [vmem:[%s3 + $0x8] sm:$0xf]
        %v1870 = vld [vmem:[%s3 + $0xc] sm:$0xf]
        %v1871 = vld [vmem:[%s3 + $0x10] sm:$0xf]
        %v1872 = vld [vmem:[%s3 + $0x14] sm:$0xf]
        %v1873 = vld [vmem:[%s3 + $0x18] sm:$0xf]
        %v1874 = vld [vmem:[%s3 + $0x1c] sm:$0xf]
        %v1875 = vld [vmem:[%s3 + $0x20] sm:$0xf]
        %v1876 = vld [vmem:[%s3 + $0x24] sm:$0xf]
        %v1877 = vld [vmem:[%s3 + $0x28] sm:$0xf]
        %v1878 = vld [vmem:[%s3 + $0x2c] sm:$0xf]
        %v1879 = vld [vmem:[%s3 + $0x30] sm:$0xf]
        %v1880 = vld [vmem:[%s3 + $0x34] sm:$0xf]
        %v1881 = vld [vmem:[%s3 + $0x38] sm:$0xf]
        %v1882 = vld [vmem:[%s3 + $0x3c] sm:$0xf]
        %v1883 = vlaneseq
        %v1884 = vshrl.u32 %v1883, 7
        %v1885 = vsub.s32 0, %v1884
        %v1886 = vrot.slane %v269, %v1885
        %v1903 = vunpack.c.l.b16 %v1867
        %v1904 = vunpack.c.l.b16 %v1868
        %v1905 = vunpack.c.l.b16 %v1869
        %v1906 = vunpack.c.l.b16 %v1870
        %v1907 = vunpack.c.l.b16 %v1871
        %v1908 = vunpack.c.l.b16 %v1872
        %v1909 = vunpack.c.l.b16 %v1873
        %v1910 = vunpack.c.l.b16 %v1874
        %v1911 = vunpack.c.l.b16 %v1875
        %v1912 = vunpack.c.l.b16 %v1876
        %v1913 = vunpack.c.l.b16 %v1877
        %v1914 = vunpack.c.l.b16 %v1878
        %v1915 = vunpack.c.l.b16 %v1879
        %v1916 = vunpack.c.l.b16 %v1880
        %v1917 = vunpack.c.l.b16 %v1881
        %v1918 = vunpack.c.l.b16 %v1882
        %v1919 = vpack.c.b16 %v1904, %v1903
        %v1920 = vpack.c.b16 %v1906, %v1905
        %v1921 = vpack.c.b16 %v1908, %v1907
        %v1922 = vpack.c.b16 %v1910, %v1909
        %v1923 = vpack.c.b16 %v1912, %v1911
        %v1924 = vpack.c.b16 %v1914, %v1913
        %v1925 = vpack.c.b16 %v1916, %v1915
        %v1926 = vpack.c.b16 %v1918, %v1917
        %1935 = vmatprep.subr.bf16.mxu0 0
        %1936 = vmatpush1.bf16.msra.mxu0 %v1919
        %1937 = vmatprep.subr.bf16.mxu0 0
        %1938 = vmatpush1.bf16.msra.mxu0 %v1920
        %1939 = vmatprep.subr.bf16.mxu0 0
        %1940 = vmatpush1.bf16.msra.mxu0 %v1921
        %1941 = vmatprep.subr.bf16.mxu0 0
        %1942 = vmatpush1.bf16.msra.mxu0 %v1922
        %1943 = vmatprep.subr.bf16.mxu0 0
        %1944 = vmatpush1.bf16.msra.mxu0 %v1923
        %1945 = vmatprep.subr.bf16.mxu0 0
        %1946 = vmatpush1.bf16.msra.mxu0 %v1924
        %1947 = vmatprep.subr.bf16.mxu0 0
        %1948 = vmatpush1.bf16.msra.mxu0 %v1925
        %1949 = vmatprep.subr.bf16.mxu0 0
        %1950 = vmatpush1.bf16.msra.mxu0 %v1926
        %1951 = vmatprep.subr.bf16.mxu0 0
        %1952 = vmatpush1.bf16.msra.mxu0 0
        %1953 = vmatprep.subr.bf16.mxu0 0
        %1954 = vmatpush1.bf16.msra.mxu0 0
        %1955 = vmatprep.subr.bf16.mxu0 0
        %1956 = vmatpush1.bf16.msra.mxu0 0
        %1957 = vmatprep.subr.bf16.mxu0 0
        %1958 = vmatpush1.bf16.msra.mxu0 0
        %1959 = vmatprep.subr.bf16.mxu0 0
        %1960 = vmatpush1.bf16.msra.mxu0 0
        %1961 = vmatprep.subr.bf16.mxu0 0
        %1962 = vmatpush1.bf16.msra.mxu0 0
        %1963 = vmatprep.subr.bf16.mxu0 0
        %1964 = vmatpush1.bf16.msra.mxu0 0
        %1965 = vmatprep.subr.bf16.mxu0 0
        %1966 = vmatpush1.bf16.msra.mxu0 0
        %1967 = vmatprep.mubr.bf16.mxu0 0
        %1968 = vmatmul.mubr.bf16.gmra.mrb[0].mxu0 %v1866
        %v1969 = vpop.f32.mrb[0].mxu0
        %v1970 = vadd.f32 %v1886, %v1969
        %v1971 = vpop.f32.mrb[0].mxu0
        %v1972 = vpop.f32.mrb[0].mxu0
        %v1973 = vpop.f32.mrb[0].mxu0
        %1974 = vdwg.mxu0
        %v1975 = vadd.f32 %v1771, %v1970
        %1976 = vst.msk [vmem:[%s257] sm:$0xff] %vm271, %v1975
        %s1977 = sand.u32 %s160, 1
        %s1978 = scalar_lea.sflag [#allocation4], %s1977
        %s1979 = sand.u32 %s160, 1
        %s1980 = smul.addr %s1979, 8
        %s1981 = scalar_lea.vmem [#allocation5], %s1980
        // Predicated region
        $region49: #{tpu_custom_call.1} parent=43 // pred_check
          %p1982 = pneg %p170
        $region50: #{tpu_custom_call.1} parent=43 // pred_check_branch
          %1984 = sbr.rel (%p1982) target = $region52
        $region51: #{tpu_custom_call.1} parent=43 // pred_region
          %s1986 = ssub.s32 128, 128
          %1987 = vsyncadd %s1978, %s1986
          %s1988 = smul.addr %s21, 128
          %s1989 = scalar_lea.hbm %s6, %s1988
          %s1991 = sshll.u32 %s1981, 4
          %s1992 = int_to_ptr.vmem [resolvable:$true] %s1991
          %1994 = dma.vmem_to_hbm [thread:$0]  %s1992, 128, %s1989, %s1978
        $region52: #{tpu_custom_call.1} parent=43 // pred_fallthru
          _
      $region44: #{tpu_custom_call.1} parent=5 // pred_fallthru
        _
      %p1995 = scmp.le.s32.totalorder 2, %s16
      // Predicated region
      $region53: #{tpu_custom_call.1} parent=5 // pred_check
        %p1996 = pneg %p1995
      $region54: #{tpu_custom_call.1} parent=5 // pred_check_branch
        %1998 = sbr.rel (%p1996) target = $region56
      $region55: #{tpu_custom_call.1} parent=5 // pred_region
        %s1999 = ssub.s32 %s16, 2
        // Predicated region
        $region57: #{tpu_custom_call.1} parent=55 // pred_check
          %p2000 = pneg %p176
        $region58: #{tpu_custom_call.1} parent=55 // pred_check_branch
          %2002 = sbr.rel (%p2000) target = $region60
        $region59: #{tpu_custom_call.1} parent=55 // pred_region
          %s2003 = sand.u32 %s161, 1
          %s2004 = scalar_lea.sflag [#allocation4], %s2003
          %s2005 = sand.u32 %s161, 1
          %s2006 = smul.addr %s2005, 8
          %s2007 = scalar_lea.vmem [#allocation5], %s2006
          %2008 = dma.done %s2004, 128
        $region60: #{tpu_custom_call.1} parent=55 // pred_fallthru
          _
      $region56: #{tpu_custom_call.1} parent=5 // pred_fallthru
        _
    $region6: #{tpu_custom_call.1} parent=1 // loop_footer
      %s20 = sadd.s32 1, %s16
    $region7: #{tpu_custom_call.1} parent=1 // loop_footer_branch
      %15 = sbr.rel target = $region3
    $region8: #{tpu_custom_call.1} parent=1 // loop_exit
      _
    %2009 = vsyncpa [#allocation3], 1
    %s2010 = scalar_lea.sflag [#allocation3], 1
    %2011 = vsyncpa %s2010, 1
    %2012 = vsyncpa [#allocation4], 1
    %s2013 = scalar_lea.sflag [#allocation4], 1
    %2014 = vsyncpa %s2013, 1

</llo_original>
